<compile_context>
chip_gen: v5e
topology: v5e:2x2
jax: 0.10.0
libtpu: 0.0.40
codegen_flags: <defaults>
</compile_context>

<pallas_src>
import jax
import jax.numpy as jnp
from jax import lax
from jax.experimental import pallas as pl
from jax.experimental.pallas import tpu as pltpu

NUM_PIXELS = 130          # the module samples 130 pixels -> reshaped (26, 5)
P_PAD = 256               # lane-dense padded pixel axis (130 real + 126 zero cols)
KMEANS_ITERS = 20
CENT_SENTINEL = 1e15      # padded-cluster centroid value (never wins an argmin)


def _round_up(a, b):
    return ((a + b - 1) // b) * b


# ----------------------------------------------------------------------------
# Fused bilinear-downsample + pixel-sampling matmul
# ----------------------------------------------------------------------------
def _bilinear_weights(out_size, in_size):
    """1-D bilinear interpolation weights, PyTorch align_corners=False."""
    scale = in_size / out_size
    src = (jnp.arange(out_size, dtype=jnp.float32) + 0.5) * scale - 0.5
    src = jnp.clip(src, 0.0, in_size - 1)
    i0 = jnp.floor(src).astype(jnp.int32)
    i1 = jnp.minimum(i0 + 1, in_size - 1)
    w1 = src - i0.astype(jnp.float32)
    w0 = 1.0 - w1
    w = jnp.zeros((out_size, in_size), jnp.float32)
    w = w.at[jnp.arange(out_size), i0].add(w0)
    w = w.at[jnp.arange(out_size), i1].add(w1)
    return w


def _build_sample_weights(h, w, new_h, new_w, rand_idx):
    """(H*W, P_PAD) bf16: column p<130 is the bilinear stencil of sampled pixel p,
    columns >=130 are zero (pure lane padding)."""
    wh = _bilinear_weights(new_h, h)                       # (nH, H)
    ww = _bilinear_weights(new_w, w)                       # (nW, W)
    wfull = jnp.einsum("ah,bw->abhw", wh, ww).reshape(new_h * new_w, h * w)
    wsamp = wfull[rand_idx].T                              # (H*W, 130)
    wsamp = jnp.pad(wsamp, ((0, 0), (0, P_PAD - NUM_PIXELS)))
    # the x4 align_corners=False weights are exactly 0.25 -> bf16 is lossless
    return wsamp.astype(jnp.bfloat16)


def _sample_matmul_kernel(x_ref, w_ref, o_ref, acc_ref):
    @pl.when(pl.program_id(1) == 0)
    def _():
        acc_ref[...] = jnp.zeros_like(acc_ref)
    acc_ref[...] += jnp.dot(x_ref[...], w_ref[...],
                            preferred_element_type=jnp.float32)
    @pl.when(pl.program_id(1) == pl.num_programs(1) - 1)
    def _():
        o_ref[...] = acc_ref[...]


@jax.jit
def downsample_and_sample(x2d, wsamp):
    """x2d: (M, H*W) bf16 planes; wsamp: (H*W, P_PAD) bf16.  Returns (M, P_PAD) f32."""
    m, hw = x2d.shape
    p = wsamp.shape[1]
    # fixed-size M tile (multiple of 8) -> real multi-step grid, bounded VMEM,
    # both v7x TensorCores load-balanced; remainder rows are zero-padded.
    tm = min(256, _round_up(m, 8))
    m_pad = _round_up(m, tm)
    # K-tile the H*W contraction when it is large so the weight / x tiles fit
    # v7x's 64 MiB VMEM; small H*W uses a single full-width K step.
    if hw > 4096:
        tk = 2048
        hw_pad = _round_up(hw, tk)
    else:
        tk = hw
        hw_pad = hw
    if m_pad != m or hw_pad != hw:
        x2d = jnp.pad(x2d, ((0, m_pad - m), (0, hw_pad - hw)))
    if hw_pad != hw:
        wsamp = jnp.pad(wsamp, ((0, hw_pad - hw), (0, 0)))
    out = pl.pallas_call(
        _sample_matmul_kernel,
        out_shape=jax.ShapeDtypeStruct((m_pad, p), jnp.float32),
        grid=(m_pad // tm, hw_pad // tk),
        in_specs=[
            pl.BlockSpec((tm, tk), lambda i, k: (i, k)),
            pl.BlockSpec((tk, p), lambda i, k: (k, 0)),
        ],
        out_specs=pl.BlockSpec((tm, p), lambda i, k: (i, 0)),
        scratch_shapes=[pltpu.VMEM((tm, p), jnp.float32)],
        compiler_params=pltpu.CompilerParams(
            dimension_semantics=("parallel", "arbitrary"),
            vmem_limit_bytes=48 * 1024 * 1024),
    )(x2d, wsamp)
    return out[:m]


# ----------------------------------------------------------------------------
# Fused Lloyd k-means (all iterations) + Calinski-Harabasz score, grid=(B,)
# ----------------------------------------------------------------------------
def _make_kmeans_ch_kernel(n_points, kmax, c_dim, iters):
    n_f = float(n_points)

    def kernel(kk_ref, x_ref, cent0_ref, o_ref):
        x_aug = x_ref[0]                     # (C+1, N): channels + a ones row
        x = x_aug[:c_dim, :]                 # (C, N), N on the lane axis
        row_ids = lax.broadcasted_iota(jnp.int32, (kmax, n_points), 0)

        def assign_stats(cent):
            # cent: (Kmax, C); padded rows hold CENT_SENTINEL -> never win argmin
            # distances via MXU cross-term: ||c_k||^2 - 2 c_k.x  (||x||^2 dropped,
            # it is constant per column and does not affect the argmin)
            cnorm = jnp.sum(cent * cent, axis=1, keepdims=True)          # (Kmax,1)
            cross = lax.dot_general(cent, x, (((1,), (0,)), ((), ())),
                                    preferred_element_type=jnp.float32)  # (Kmax,N)
            d = cnorm - 2.0 * cross
            # lane-dense argmin: sublane min-reduce + lowest-index tie-break
            best_d = jnp.min(d, axis=0, keepdims=True)                   # (1, N)
            at_min = d == best_d
            best_row = jnp.min(jnp.where(at_min, row_ids, kmax),
                               axis=0, keepdims=True)                    # (1, N)
            onehot = (row_ids == best_row).astype(jnp.float32)           # (Kmax,N)
            # per-cluster sums AND counts in one MXU matmul (ones row of x_aug)
            stats = lax.dot_general(onehot, x_aug, (((1,), (1,)), ((), ())),
                                    preferred_element_type=jnp.float32)  # (Kmax,C+1)
            return stats[:, :c_dim], stats[:, c_dim:c_dim + 1]

        def lloyd_step(_, cent):
            sums, counts = assign_stats(cent)
            safe = jnp.maximum(counts, 1.0)
            # empty (or padded) clusters keep their previous centroid
            return jnp.where(counts > 0.0, sums / safe, cent)

        cent = lax.fori_loop(0, iters, lloyd_step, cent0_ref[0], unroll=2)
        sums, counts = assign_stats(cent)

        # --- Calinski-Harabasz score (cl_func) -------------------------------
        nonempty = counts > 0.0
        safe = jnp.maximum(counts, 1.0)
        a_term = jnp.sum(jnp.where(
            nonempty, jnp.sum(sums * sums, axis=1, keepdims=True) / safe, 0.0))
        total_sq = jnp.sum(x * x)
        col_sums = jnp.sum(x, axis=1, keepdims=True)          # (C, 1)
        total_sum_sq = jnp.sum(col_sums * col_sums)
        intra = jnp.maximum(total_sq - a_term, 0.0)            # within-cluster SS
        extra = jnp.maximum(a_term - total_sum_sq / n_f, 0.0)  # between-cluster SS
        k_used = jnp.sum(nonempty.astype(jnp.float32))         # non-empty clusters
        ch = jnp.where(
            intra <= 0.0, 1.0,
            extra * (n_f - k_used) / (jnp.maximum(intra, 1e-12)
                                      * jnp.maximum(k_used - 1.0, 1.0)))
        k_req = kk_ref[pl.program_id(0)]
        contrib = jnp.where(k_req > 1, 250.0 / (1.0 + ch), 0.0)
        # lane-padded output block -> unmasked store
        o_ref[...] = jnp.broadcast_to(contrib, (1, 1, 128)).astype(jnp.float32)

    return kernel


@jax.jit
def kmeans_ch_scores(kk_arr, x_aug, cent0):
    """Per-batch fused k-means + CH contribution.  Returns (B,) scores."""
    b, c_aug, n = x_aug.shape
    c = c_aug - 1
    kmax = cent0.shape[1]
    kernel = _make_kmeans_ch_kernel(n, kmax, c, KMEANS_ITERS)
    out = pl.pallas_call(
        kernel,
        out_shape=jax.ShapeDtypeStruct((b, 1, 128), jnp.float32),
        grid_spec=pltpu.PrefetchScalarGridSpec(
            num_scalar_prefetch=1,
            grid=(b,),
            in_specs=[
                pl.BlockSpec((1, c_aug, n), lambda i, kk: (i, 0, 0)),
                pl.BlockSpec((1, kmax, c), lambda i, kk: (i, 0, 0)),
            ],
            out_specs=pl.BlockSpec((1, 1, 128), lambda i, kk: (i, 0, 0)),
        ),
        compiler_params=pltpu.CompilerParams(
            dimension_semantics=("parallel",)),
    )(kk_arr, x_aug, cent0)
    return out[:, 0, 0]


# ----------------------------------------------------------------------------
# QCC.forward equivalent (cl_func)
# ----------------------------------------------------------------------------
def qcc_forward(x, KK, key, functionname="cl_func"):
    # TODO(synk): db_func / sl_func / spv_func depend on sklearn
    # (davies_bouldin_score, silhouette_score, SVC support-vector scoring) and
    # have no clean Pallas equivalent; only cl_func is implemented here.
    assert functionname == "cl_func", "only cl_func is implemented"
    b, c, t, h, w = x.shape
    new_h, new_w = h // 4, w // 4
    assert new_h * new_w >= NUM_PIXELS, "spatial dims too small to sample 130 pixels"

    kk_list = [int(v) for v in KK]
    kmax = max(kk_list)

    key_perm, key_init = jax.random.split(key)
    rand_idx = jax.random.permutation(key_perm, new_h * new_w)[:NUM_PIXELS]
    wsamp = _build_sample_weights(h, w, new_h, new_w, rand_idx)   # (H*W, 256) bf16

    # fused downsample + sampling: (B*C*T, H*W) @ (H*W, 256) in bf16, f32 out
    x2d = x.reshape(b * c * t, h * w).astype(jnp.bfloat16)
    sampled = downsample_and_sample(x2d, wsamp)                   # (B*C*T, 256) f32

    n_points = t * NUM_PIXELS
    # (B, C, N): drop the 126 zero-padded columns; point ordering matches
    # tensor[i].permute(1,2,3,0).reshape(-1, C) in the reference (N = T*130 on lanes).
    x_all = sampled[:, :NUM_PIXELS].reshape(b, c, n_points)
    # append a constant ones channel so the k-means kernel gets counts from the MXU
    x_aug = jnp.concatenate(
        [x_all, jnp.ones((b, 1, n_points), jnp.float32)], axis=1)

    # keeptime is only consumed by spv_func in the reference module (unused here)

    if kmax <= 1:
        return jnp.float32(1.0)          # every cl_func term is 0.0

    # random-point initial centroids, padded to Kmax per batch element;
    # padded rows get a huge sentinel so they never win an assignment.
    # TODO(synk): sklearn KMeans uses k-means++ init with multiple restarts;
    # approximated here with random-point init + fixed 20 Lloyd iterations.
    keys = jax.random.split(key_init, b)
    init_idx = jnp.stack([
        jax.random.choice(keys[i], n_points, shape=(kmax,), replace=False)
        for i in range(b)])                                       # (B, Kmax)
    cent0 = jax.vmap(lambda xb, ib: xb[:, ib].T)(x_all, init_idx)  # (B, Kmax, C)
    kk_arr = jnp.asarray(kk_list, dtype=jnp.int32)
    k_ids = jnp.arange(kmax)[None, :, None]
    cent0 = jnp.where(k_ids < kk_arr[:, None, None], cent0,
                      jnp.float32(CENT_SENTINEL))

    contribs = kmeans_ch_scores(kk_arr, x_aug, cent0)             # (B,)
    score = 1.0 + jnp.sum(contribs) / b
    return jnp.asarray(score, dtype=jnp.float32)


if __name__ == "__main__":
    key = jax.random.PRNGKey(0)
    key_x, key_fwd = jax.random.split(key)
    B, C, T, H, W = 2, 4, 8, 48, 48          # H//4 * W//4 = 144 >= 130 pixels
    x = jax.random.normal(key_x, (B, C, T, H, W), dtype=jnp.float32)
    KK = [3, 4]                              # clusters per batch element
    out = qcc_forward(x, KK, key_fwd, functionname="cl_func")
    jax.block_until_ready(out)
    print("KERNEL_OK")
</pallas_src>

<mosaic_0001>
module attributes {stable_mosaic.version = 11 : i64} {
  func.func @_sample_matmul_kernel(%arg0: i32, %arg1: i32, %arg2: memref<64x2304xbf16, #tpu.memory_space<vmem>>, %arg3: memref<2304x256xbf16, #tpu.memory_space<vmem>>, %arg4: memref<64x256xf32, #tpu.memory_space<vmem>>, %arg5: memref<64x256xf32, #tpu.memory_space<vmem>>) attributes {dimension_semantics = [#tpu.dimension_semantics<parallel>, #tpu.dimension_semantics<arbitrary>], iteration_bounds = array<i64: 1, 1>, scalar_prefetch = 0 : i64, scratch_operands = 1 : i64, tpu.core_type = #tpu.core_type<tc>, window_params = [{transform_indices = @transform_0, window_bounds = array<i64: 64, 2304>}, {transform_indices = @transform_1, window_bounds = array<i64: 2304, 256>}, {transform_indices = @transform_2, window_bounds = array<i64: 64, 256>}]} {
    %c0_i32 = arith.constant 0 : i32
    %0 = arith.cmpi eq, %arg1, %c0_i32 : i32
    %1 = arith.extui %0 : i1 to i32
    %c0_i32_0 = arith.constant 0 : i32
    %2 = arith.cmpi ne, %1, %c0_i32_0 : i32
    scf.if %2 {
      %cst_10 = arith.constant 0.000000e+00 : f32
      %12 = vector.broadcast %cst_10 : f32 to vector<64x256xf32>
      %c0_11 = arith.constant 0 : index
      %c0_12 = arith.constant 0 : index
      %13 = vector.load %arg5[%c0_11, %c0_12] : memref<64x256xf32, #tpu.memory_space<vmem>>, vector<64x256xf32>
      tpu.vector_store %arg5[%c0_11, %c0_12], %12 {strides = array<i32>} : memref<64x256xf32, #tpu.memory_space<vmem>>, vector<64x256xf32>,
    } else {
    }
    %c0 = arith.constant 0 : index
    %c0_1 = arith.constant 0 : index
    %3 = vector.load %arg5[%c0, %c0_1] : memref<64x256xf32, #tpu.memory_space<vmem>>, vector<64x256xf32>
    %c0_2 = arith.constant 0 : index
    %c0_3 = arith.constant 0 : index
    %4 = vector.load %arg2[%c0_2, %c0_3] : memref<64x2304xbf16, #tpu.memory_space<vmem>>, vector<64x2304xbf16>
    %c0_4 = arith.constant 0 : index
    %c0_5 = arith.constant 0 : index
    %5 = vector.load %arg3[%c0_4, %c0_5] : memref<2304x256xbf16, #tpu.memory_space<vmem>>, vector<2304x256xbf16>
    %cst = arith.constant dense<0.000000e+00> : vector<64x256xf32>
    %6 = tpu.matmul %4, %5, %cst {dimension_numbers = #tpu.dot_dimension_numbers<[1], [0], [0], [1], [0, 0, 1, 1], [], []>} : vector<64x2304xbf16>, vector<2304x256xbf16>, vector<64x256xf32> -> vector<64x256xf32>
    %7 = arith.addf %3, %6 : vector<64x256xf32>
    %c0_6 = arith.constant 0 : index
    %c0_7 = arith.constant 0 : index
    %8 = vector.load %arg5[%c0_6, %c0_7] : memref<64x256xf32, #tpu.memory_space<vmem>>, vector<64x256xf32>
    tpu.vector_store %arg5[%c0_6, %c0_7], %7 {strides = array<i32>} : memref<64x256xf32, #tpu.memory_space<vmem>>, vector<64x256xf32>,
    %c0_i32_8 = arith.constant 0 : i32
    %9 = arith.cmpi eq, %arg1, %c0_i32_8 : i32
    %10 = arith.extui %9 : i1 to i32
    %c0_i32_9 = arith.constant 0 : i32
    %11 = arith.cmpi ne, %10, %c0_i32_9 : i32
    scf.if %11 {
      %c0_10 = arith.constant 0 : index
      %c0_11 = arith.constant 0 : index
      %12 = vector.load %arg5[%c0_10, %c0_11] : memref<64x256xf32, #tpu.memory_space<vmem>>, vector<64x256xf32>
      %c0_12 = arith.constant 0 : index
      %c0_13 = arith.constant 0 : index
      %13 = vector.load %arg4[%c0_12, %c0_13] : memref<64x256xf32, #tpu.memory_space<vmem>>, vector<64x256xf32>
      tpu.vector_store %arg4[%c0_12, %c0_13], %12 {strides = array<i32>} : memref<64x256xf32, #tpu.memory_space<vmem>>, vector<64x256xf32>,
    } else {
    }
    return
  }
  func.func @transform_0(%arg0: i32, %arg1: i32) -> (i32, i32) {
    %c0_i32 = arith.constant 0 : i32
    return %arg0, %arg1 : i32, i32
  }
  func.func @transform_1(%arg0: i32, %arg1: i32) -> (i32, i32) {
    %c0_i32 = arith.constant 0 : i32
    %c0_i32_0 = arith.constant 0 : i32
    return %arg1, %c0_i32 : i32, i32
  }
  func.func @transform_2(%arg0: i32, %arg1: i32) -> (i32, i32) {
    %c0_i32 = arith.constant 0 : i32
    %c0_i32_0 = arith.constant 0 : i32
    return %arg0, %c0_i32 : i32, i32
  }
}

</mosaic_0001>

<llo_original>
// kernel: downsample_and_sample.1
$region0: #{downsample_and_sample.1}
  #allocation0 [shape = 'u32[]', space=smem, size = 0x4, offset = 0x4, fixed_abs, tag = 'smem constant byte address 0x4 - core index']
  #allocation1 [shape = 'u32[72,128]{1,0:T(1,128)}', space=vmem, size = 0x9000, scoped, tag = 'internal scratch']
  #allocation2 [shape = 'f32[64,256]{1,0:T(8,128)}', space=vmem, size = 0x10000, scoped, tag = 'scratch operand']
  %s0 = inlined_call_operand.hbm [shape: bf16[64,2304], index: 0, kind: input, shape index: {}]
  %s1 = inlined_call_operand.hbm [shape: bf16[2304,256], index: 1, kind: input, shape index: {}]
  %s2 = inlined_call_operand.hbm [shape: f32[64,256], index: 2, kind: output, shape index: {}]
  %s3 = sld [smem:[#allocation0]]
  $region34: #{downsample_and_sample.1} parent=0
    _
  %s5 = ssub.s32 1, %s3
  %s6 = scalar_select 0, %s5, %s3
  $region1: #{downsample_and_sample.1} parent=0
    #allocation3 [shape = 'u8[294912]{0}', space=vmem, size = 0x48000, scoped, tag = 'input window, operand 0, single buffered']
    #allocation4 [shape = 's32[1]{0}', space=sflag, size = 0x4, scoped, tag = 'scoped memory for downsample_and_sample.1']
    #allocation5 [shape = 's32[1]{0}', space=sflag, size = 0x4, scoped, tag = 'scoped memory for downsample_and_sample.1']
    #allocation6 [shape = 'u8[1179648]{0}', space=vmem, size = 0x120000, scoped, tag = 'input window, operand 1, single buffered']
    #allocation7 [shape = 's32[1]{0}', space=sflag, size = 0x4, scoped, tag = 'scoped memory for downsample_and_sample.1']
    #allocation8 [shape = 'u8[65536]{0}', space=vmem, size = 0x10000, scoped, tag = 'output window, operand 0, single buffered']
    %7 = vsyncpa [#allocation4], 0
    %8 = vsyncpa [#allocation7], 0
    %9 = vsyncpa [#allocation5], 0
    // Predicated region
    $region2: #{downsample_and_sample.1} parent=1 // pred_check
      _
    $region3: #{downsample_and_sample.1} parent=1 // pred_check_branch
      %11 = sbr.rel (0) target = $region5
    $region4: #{downsample_and_sample.1} parent=1 // pred_region
      %13 = vsyncadd [#allocation4], 0
      %s14 = sshll.u32 %s0, 4
      %s15 = int_to_ptr.hbm [resolvable:$true] %s14
      %s16 = sshll.u32 [#allocation3], 4
      %s17 = int_to_ptr.vmem [resolvable:$true] %s16
      %22 = dma.hbm_to_vmem [thread:$0]  %s15, 9216, %s17, [#allocation4], 1152, 1152, 72
    $region5: #{downsample_and_sample.1} parent=1 // pred_fallthru
      _
    // Predicated region
    $region6: #{downsample_and_sample.1} parent=1 // pred_check
      _
    $region7: #{downsample_and_sample.1} parent=1 // pred_check_branch
      %24 = sbr.rel (0) target = $region9
    $region8: #{downsample_and_sample.1} parent=1 // pred_region
      %26 = vsyncadd [#allocation7], 0
      %s27 = sshll.u32 %s1, 4
      %s28 = int_to_ptr.hbm [resolvable:$true] %s27
      %s29 = sshll.u32 [#allocation6], 4
      %s30 = int_to_ptr.vmem [resolvable:$true] %s29
      %35 = dma.hbm_to_vmem [thread:$0]  %s28, 36864, %s30, [#allocation7], 128, 128, 8
    $region9: #{downsample_and_sample.1} parent=1 // pred_fallthru
      _
    // Predicated region
    $region10: #{downsample_and_sample.1} parent=1 // pred_check
      _
    $region11: #{downsample_and_sample.1} parent=1 // pred_check_branch
      %37 = sbr.rel (0) target = $region13
    $region12: #{downsample_and_sample.1} parent=1 // pred_region
      %39 = dma.done [#allocation4], 9216
    $region13: #{downsample_and_sample.1} parent=1 // pred_fallthru
      _
    // Predicated region
    $region14: #{downsample_and_sample.1} parent=1 // pred_check
      _
    $region15: #{downsample_and_sample.1} parent=1 // pred_check_branch
      %41 = sbr.rel (0) target = $region17
    $region16: #{downsample_and_sample.1} parent=1 // pred_region
      %43 = dma.done [#allocation7], 36864
    $region17: #{downsample_and_sample.1} parent=1 // pred_fallthru
      _
    %p44 = scmp.eq.s32.totalorder 0, 0
    // Predicated region
    $region18: #{downsample_and_sample.1} parent=1 // pred_check
      %p45 = pneg %p44
    $region19: #{downsample_and_sample.1} parent=1 // pred_check_branch
      %47 = sbr.rel (%p45) target = $region21
    $region20: #{downsample_and_sample.1} parent=1 // pred_region
      %48 = vst [vmem:[#allocation2] sm:$0xff] 0.0
      %49 = vst [vmem:[#allocation2 + $0x8] sm:$0xff] 0.0
      %50 = vst [vmem:[#allocation2 + $0x10] sm:$0xff] 0.0
      %51 = vst [vmem:[#allocation2 + $0x18] sm:$0xff] 0.0
      %52 = vst [vmem:[#allocation2 + $0x20] sm:$0xff] 0.0
      %53 = vst [vmem:[#allocation2 + $0x28] sm:$0xff] 0.0
      %54 = vst [vmem:[#allocation2 + $0x30] sm:$0xff] 0.0
      %55 = vst [vmem:[#allocation2 + $0x38] sm:$0xff] 0.0
      %56 = vst [vmem:[#allocation2 + $0x40] sm:$0xff] 0.0
      %57 = vst [vmem:[#allocation2 + $0x48] sm:$0xff] 0.0
      %58 = vst [vmem:[#allocation2 + $0x50] sm:$0xff] 0.0
      %59 = vst [vmem:[#allocation2 + $0x58] sm:$0xff] 0.0
      %60 = vst [vmem:[#allocation2 + $0x60] sm:$0xff] 0.0
      %61 = vst [vmem:[#allocation2 + $0x68] sm:$0xff] 0.0
      %62 = vst [vmem:[#allocation2 + $0x70] sm:$0xff] 0.0
      %63 = vst [vmem:[#allocation2 + $0x78] sm:$0xff] 0.0
    $region21: #{downsample_and_sample.1} parent=1 // pred_fallthru
      _
    %v64 = vld [vmem:[#allocation2] sm:$0xff]
    %v65 = vld [vmem:[#allocation2 + $0x8] sm:$0xff]
    %v66 = vld [vmem:[#allocation2 + $0x10] sm:$0xff]
    %v67 = vld [vmem:[#allocation2 + $0x18] sm:$0xff]
    %v68 = vld [vmem:[#allocation2 + $0x20] sm:$0xff]
    %v69 = vld [vmem:[#allocation2 + $0x28] sm:$0xff]
    %v70 = vld [vmem:[#allocation2 + $0x30] sm:$0xff]
    %v71 = vld [vmem:[#allocation2 + $0x38] sm:$0xff]
    %v72 = vld [vmem:[#allocation2 + $0x40] sm:$0xff]
    %v73 = vld [vmem:[#allocation2 + $0x48] sm:$0xff]
    %v74 = vld [vmem:[#allocation2 + $0x50] sm:$0xff]
    %v75 = vld [vmem:[#allocation2 + $0x58] sm:$0xff]
    %v76 = vld [vmem:[#allocation2 + $0x60] sm:$0xff]
    %v77 = vld [vmem:[#allocation2 + $0x68] sm:$0xff]
    %v78 = vld [vmem:[#allocation2 + $0x70] sm:$0xff]
    %v79 = vld [vmem:[#allocation2 + $0x78] sm:$0xff]
    %v80 = vld [vmem:[#allocation3] sm:$0xff]
    %v81 = vld [vmem:[#allocation3 + $0x8] sm:$0xff]
    %v82 = vld [vmem:[#allocation3 + $0x10] sm:$0xff]
    %v83 = vld [vmem:[#allocation3 + $0x18] sm:$0xff]
    %v84 = vld [vmem:[#allocation3 + $0x20] sm:$0xff]
    %v85 = vld [vmem:[#allocation3 + $0x28] sm:$0xff]
    %v86 = vld [vmem:[#allocation3 + $0x30] sm:$0xff]
    %v87 = vld [vmem:[#allocation3 + $0x38] sm:$0xff]
    %v88 = vld [vmem:[#allocation3 + $0x40] sm:$0xff]
    %v89 = vld [vmem:[#allocation3 + $0x48] sm:$0xff]
    %v90 = vld [vmem:[#allocation3 + $0x50] sm:$0xff]
    %v91 = vld [vmem:[#allocation3 + $0x58] sm:$0xff]
    %v92 = vld [vmem:[#allocation3 + $0x60] sm:$0xff]
    %v93 = vld [vmem:[#allocation3 + $0x68] sm:$0xff]
    %v94 = vld [vmem:[#allocation3 + $0x70] sm:$0xff]
    %v95 = vld [vmem:[#allocation3 + $0x78] sm:$0xff]
    %v96 = vld [vmem:[#allocation3 + $0x80] sm:$0xff]
    %v97 = vld [vmem:[#allocation3 + $0x88] sm:$0xff]
    %v98 = vld [vmem:[#allocation3 + $0x90] sm:$0xff]
    %v99 = vld [vmem:[#allocation3 + $0x98] sm:$0xff]
    %v100 = vld [vmem:[#allocation3 + $0xa0] sm:$0xff]
    %v101 = vld [vmem:[#allocation3 + $0xa8] sm:$0xff]
    %v102 = vld [vmem:[#allocation3 + $0xb0] sm:$0xff]
    %v103 = vld [vmem:[#allocation3 + $0xb8] sm:$0xff]
    %v104 = vld [vmem:[#allocation3 + $0xc0] sm:$0xff]
    %v105 = vld [vmem:[#allocation3 + $0xc8] sm:$0xff]
    %v106 = vld [vmem:[#allocation3 + $0xd0] sm:$0xff]
    %v107 = vld [vmem:[#allocation3 + $0xd8] sm:$0xff]
    %v108 = vld [vmem:[#allocation3 + $0xe0] sm:$0xff]
    %v109 = vld [vmem:[#allocation3 + $0xe8] sm:$0xff]
    %v110 = vld [vmem:[#allocation3 + $0xf0] sm:$0xff]
    %v111 = vld [vmem:[#allocation3 + $0xf8] sm:$0xff]
    %v112 = vld [vmem:[#allocation3 + $0x100] sm:$0xff]
    %v113 = vld [vmem:[#allocation3 + $0x108] sm:$0xff]
    %v114 = vld [vmem:[#allocation3 + $0x110] sm:$0xff]
    %v115 = vld [vmem:[#allocation3 + $0x118] sm:$0xff]
    %v116 = vld [vmem:[#allocation3 + $0x120] sm:$0xff]
    %v117 = vld [vmem:[#allocation3 + $0x128] sm:$0xff]
    %v118 = vld [vmem:[#allocation3 + $0x130] sm:$0xff]
    %v119 = vld [vmem:[#allocation3 + $0x138] sm:$0xff]
    %v120 = vld [vmem:[#allocation3 + $0x140] sm:$0xff]
    %v121 = vld [vmem:[#allocation3 + $0x148] sm:$0xff]
    %v122 = vld [vmem:[#allocation3 + $0x150] sm:$0xff]
    %v123 = vld [vmem:[#allocation3 + $0x158] sm:$0xff]
    %v124 = vld [vmem:[#allocation3 + $0x160] sm:$0xff]
    %v125 = vld [vmem:[#allocation3 + $0x168] sm:$0xff]
    %v126 = vld [vmem:[#allocation3 + $0x170] sm:$0xff]
    %v127 = vld [vmem:[#allocation3 + $0x178] sm:$0xff]
    %v128 = vld [vmem:[#allocation3 + $0x180] sm:$0xff]
    %v129 = vld [vmem:[#allocation3 + $0x188] sm:$0xff]
    %v130 = vld [vmem:[#allocation3 + $0x190] sm:$0xff]
    %v131 = vld [vmem:[#allocation3 + $0x198] sm:$0xff]
    %v132 = vld [vmem:[#allocation3 + $0x1a0] sm:$0xff]
    %v133 = vld [vmem:[#allocation3 + $0x1a8] sm:$0xff]
    %v134 = vld [vmem:[#allocation3 + $0x1b0] sm:$0xff]
    %v135 = vld [vmem:[#allocation3 + $0x1b8] sm:$0xff]
    %v136 = vld [vmem:[#allocation3 + $0x1c0] sm:$0xff]
    %v137 = vld [vmem:[#allocation3 + $0x1c8] sm:$0xff]
    %v138 = vld [vmem:[#allocation3 + $0x1d0] sm:$0xff]
    %v139 = vld [vmem:[#allocation3 + $0x1d8] sm:$0xff]
    %v140 = vld [vmem:[#allocation3 + $0x1e0] sm:$0xff]
    %v141 = vld [vmem:[#allocation3 + $0x1e8] sm:$0xff]
    %v142 = vld [vmem:[#allocation3 + $0x1f0] sm:$0xff]
    %v143 = vld [vmem:[#allocation3 + $0x1f8] sm:$0xff]
    %v144 = vld [vmem:[#allocation3 + $0x200] sm:$0xff]
    %v145 = vld [vmem:[#allocation3 + $0x208] sm:$0xff]
    %v146 = vld [vmem:[#allocation3 + $0x210] sm:$0xff]
    %v147 = vld [vmem:[#allocation3 + $0x218] sm:$0xff]
    %v148 = vld [vmem:[#allocation3 + $0x220] sm:$0xff]
    %v149 = vld [vmem:[#allocation3 + $0x228] sm:$0xff]
    %v150 = vld [vmem:[#allocation3 + $0x230] sm:$0xff]
    %v151 = vld [vmem:[#allocation3 + $0x238] sm:$0xff]
    %v152 = vld [vmem:[#allocation6] sm:$0xff]
    %v153 = vld [vmem:[#allocation6 + $0x8] sm:$0xff]
    %v154 = vld [vmem:[#allocation6 + $0x10] sm:$0xff]
    %v155 = vld [vmem:[#allocation6 + $0x18] sm:$0xff]
    %v156 = vld [vmem:[#allocation6 + $0x20] sm:$0xff]
    %v157 = vld [vmem:[#allocation6 + $0x28] sm:$0xff]
    %v158 = vld [vmem:[#allocation6 + $0x30] sm:$0xff]
    %v159 = vld [vmem:[#allocation6 + $0x38] sm:$0xff]
    %v160 = vld [vmem:[#allocation6 + $0x40] sm:$0xff]
    %v161 = vld [vmem:[#allocation6 + $0x48] sm:$0xff]
    %v162 = vld [vmem:[#allocation6 + $0x50] sm:$0xff]
    %v163 = vld [vmem:[#allocation6 + $0x58] sm:$0xff]
    %v164 = vld [vmem:[#allocation6 + $0x60] sm:$0xff]
    %v165 = vld [vmem:[#allocation6 + $0x68] sm:$0xff]
    %v166 = vld [vmem:[#allocation6 + $0x70] sm:$0xff]
    %v167 = vld [vmem:[#allocation6 + $0x78] sm:$0xff]
    %v168 = vld [vmem:[#allocation6 + $0x80] sm:$0xff]
    %v169 = vld [vmem:[#allocation6 + $0x88] sm:$0xff]
    %v170 = vld [vmem:[#allocation6 + $0x90] sm:$0xff]
    %v171 = vld [vmem:[#allocation6 + $0x98] sm:$0xff]
    %v172 = vld [vmem:[#allocation6 + $0xa0] sm:$0xff]
    %v173 = vld [vmem:[#allocation6 + $0xa8] sm:$0xff]
    %v174 = vld [vmem:[#allocation6 + $0xb0] sm:$0xff]
    %v175 = vld [vmem:[#allocation6 + $0xb8] sm:$0xff]
    %v176 = vld [vmem:[#allocation6 + $0xc0] sm:$0xff]
    %v177 = vld [vmem:[#allocation6 + $0xc8] sm:$0xff]
    %v178 = vld [vmem:[#allocation6 + $0xd0] sm:$0xff]
    %v179 = vld [vmem:[#allocation6 + $0xd8] sm:$0xff]
    %v180 = vld [vmem:[#allocation6 + $0xe0] sm:$0xff]
    %v181 = vld [vmem:[#allocation6 + $0xe8] sm:$0xff]
    %v182 = vld [vmem:[#allocation6 + $0xf0] sm:$0xff]
    %v183 = vld [vmem:[#allocation6 + $0xf8] sm:$0xff]
    %v184 = vld [vmem:[#allocation6 + $0x100] sm:$0xff]
    %v185 = vld [vmem:[#allocation6 + $0x108] sm:$0xff]
    %v186 = vld [vmem:[#allocation6 + $0x110] sm:$0xff]
    %v187 = vld [vmem:[#allocation6 + $0x118] sm:$0xff]
    %v188 = vld [vmem:[#allocation6 + $0x120] sm:$0xff]
    %v189 = vld [vmem:[#allocation6 + $0x128] sm:$0xff]
    %v190 = vld [vmem:[#allocation6 + $0x130] sm:$0xff]
    %v191 = vld [vmem:[#allocation6 + $0x138] sm:$0xff]
    %v192 = vld [vmem:[#allocation6 + $0x140] sm:$0xff]
    %v193 = vld [vmem:[#allocation6 + $0x148] sm:$0xff]
    %v194 = vld [vmem:[#allocation6 + $0x150] sm:$0xff]
    %v195 = vld [vmem:[#allocation6 + $0x158] sm:$0xff]
    %v196 = vld [vmem:[#allocation6 + $0x160] sm:$0xff]
    %v197 = vld [vmem:[#allocation6 + $0x168] sm:$0xff]
    %v198 = vld [vmem:[#allocation6 + $0x170] sm:$0xff]
    %v199 = vld [vmem:[#allocation6 + $0x178] sm:$0xff]
    %v200 = vld [vmem:[#allocation6 + $0x180] sm:$0xff]
    %v201 = vld [vmem:[#allocation6 + $0x188] sm:$0xff]
    %v202 = vld [vmem:[#allocation6 + $0x190] sm:$0xff]
    %v203 = vld [vmem:[#allocation6 + $0x198] sm:$0xff]
    %v204 = vld [vmem:[#allocation6 + $0x1a0] sm:$0xff]
    %v205 = vld [vmem:[#allocation6 + $0x1a8] sm:$0xff]
    %v206 = vld [vmem:[#allocation6 + $0x1b0] sm:$0xff]
    %v207 = vld [vmem:[#allocation6 + $0x1b8] sm:$0xff]
    %v208 = vld [vmem:[#allocation6 + $0x1c0] sm:$0xff]
    %v209 = vld [vmem:[#allocation6 + $0x1c8] sm:$0xff]
    %v210 = vld [vmem:[#allocation6 + $0x1d0] sm:$0xff]
    %v211 = vld [vmem:[#allocation6 + $0x1d8] sm:$0xff]
    %v212 = vld [vmem:[#allocation6 + $0x1e0] sm:$0xff]
    %v213 = vld [vmem:[#allocation6 + $0x1e8] sm:$0xff]
    %v214 = vld [vmem:[#allocation6 + $0x1f0] sm:$0xff]
    %v215 = vld [vmem:[#allocation6 + $0x1f8] sm:$0xff]
    %v216 = vld [vmem:[#allocation6 + $0x200] sm:$0xff]
    %v217 = vld [vmem:[#allocation6 + $0x208] sm:$0xff]
    %v218 = vld [vmem:[#allocation6 + $0x210] sm:$0xff]
    %v219 = vld [vmem:[#allocation6 + $0x218] sm:$0xff]
    %v220 = vld [vmem:[#allocation6 + $0x220] sm:$0xff]
    %v221 = vld [vmem:[#allocation6 + $0x228] sm:$0xff]
    %v222 = vld [vmem:[#allocation6 + $0x230] sm:$0xff]
    %v223 = vld [vmem:[#allocation6 + $0x238] sm:$0xff]
    %v224 = vld [vmem:[#allocation6 + $0x240] sm:$0xff]
    %v225 = vld [vmem:[#allocation6 + $0x248] sm:$0xff]
    %v226 = vld [vmem:[#allocation6 + $0x250] sm:$0xff]
    %v227 = vld [vmem:[#allocation6 + $0x258] sm:$0xff]
    %v228 = vld [vmem:[#allocation6 + $0x260] sm:$0xff]
    %v229 = vld [vmem:[#allocation6 + $0x268] sm:$0xff]
    %v230 = vld [vmem:[#allocation6 + $0x270] sm:$0xff]
    %v231 = vld [vmem:[#allocation6 + $0x278] sm:$0xff]
    %v232 = vld [vmem:[#allocation6 + $0x280] sm:$0xff]
    %v233 = vld [vmem:[#allocation6 + $0x288] sm:$0xff]
    %v234 = vld [vmem:[#allocation6 + $0x290] sm:$0xff]
    %v235 = vld [vmem:[#allocation6 + $0x298] sm:$0xff]
    %v236 = vld [vmem:[#allocation6 + $0x2a0] sm:$0xff]
    %v237 = vld [vmem:[#allocation6 + $0x2a8] sm:$0xff]
    %v238 = vld [vmem:[#allocation6 + $0x2b0] sm:$0xff]
    %v239 = vld [vmem:[#allocation6 + $0x2b8] sm:$0xff]
    %v240 = vld [vmem:[#allocation6 + $0x2c0] sm:$0xff]
    %v241 = vld [vmem:[#allocation6 + $0x2c8] sm:$0xff]
    %v242 = vld [vmem:[#allocation6 + $0x2d0] sm:$0xff]
    %v243 = vld [vmem:[#allocation6 + $0x2d8] sm:$0xff]
    %v244 = vld [vmem:[#allocation6 + $0x2e0] sm:$0xff]
    %v245 = vld [vmem:[#allocation6 + $0x2e8] sm:$0xff]
    %v246 = vld [vmem:[#allocation6 + $0x2f0] sm:$0xff]
    %v247 = vld [vmem:[#allocation6 + $0x2f8] sm:$0xff]
    %v248 = vld [vmem:[#allocation6 + $0x300] sm:$0xff]
    %v249 = vld [vmem:[#allocation6 + $0x308] sm:$0xff]
    %v250 = vld [vmem:[#allocation6 + $0x310] sm:$0xff]
    %v251 = vld [vmem:[#allocation6 + $0x318] sm:$0xff]
    %v252 = vld [vmem:[#allocation6 + $0x320] sm:$0xff]
    %v253 = vld [vmem:[#allocation6 + $0x328] sm:$0xff]
    %v254 = vld [vmem:[#allocation6 + $0x330] sm:$0xff]
    %v255 = vld [vmem:[#allocation6 + $0x338] sm:$0xff]
    %v256 = vld [vmem:[#allocation6 + $0x340] sm:$0xff]
    %v257 = vld [vmem:[#allocation6 + $0x348] sm:$0xff]
    %v258 = vld [vmem:[#allocation6 + $0x350] sm:$0xff]
    %v259 = vld [vmem:[#allocation6 + $0x358] sm:$0xff]
    %v260 = vld [vmem:[#allocation6 + $0x360] sm:$0xff]
    %v261 = vld [vmem:[#allocation6 + $0x368] sm:$0xff]
    %v262 = vld [vmem:[#allocation6 + $0x370] sm:$0xff]
    %v263 = vld [vmem:[#allocation6 + $0x378] sm:$0xff]
    %v264 = vld [vmem:[#allocation6 + $0x380] sm:$0xff]
    %v265 = vld [vmem:[#allocation6 + $0x388] sm:$0xff]
    %v266 = vld [vmem:[#allocation6 + $0x390] sm:$0xff]
    %v267 = vld [vmem:[#allocation6 + $0x398] sm:$0xff]
    %v268 = vld [vmem:[#allocation6 + $0x3a0] sm:$0xff]
    %v269 = vld [vmem:[#allocation6 + $0x3a8] sm:$0xff]
    %v270 = vld [vmem:[#allocation6 + $0x3b0] sm:$0xff]
    %v271 = vld [vmem:[#allocation6 + $0x3b8] sm:$0xff]
    %v272 = vld [vmem:[#allocation6 + $0x3c0] sm:$0xff]
    %v273 = vld [vmem:[#allocation6 + $0x3c8] sm:$0xff]
    %v274 = vld [vmem:[#allocation6 + $0x3d0] sm:$0xff]
    %v275 = vld [vmem:[#allocation6 + $0x3d8] sm:$0xff]
    %v276 = vld [vmem:[#allocation6 + $0x3e0] sm:$0xff]
    %v277 = vld [vmem:[#allocation6 + $0x3e8] sm:$0xff]
    %v278 = vld [vmem:[#allocation6 + $0x3f0] sm:$0xff]
    %v279 = vld [vmem:[#allocation6 + $0x3f8] sm:$0xff]
    %v280 = vld [vmem:[#allocation6 + $0x400] sm:$0xff]
    %v281 = vld [vmem:[#allocation6 + $0x408] sm:$0xff]
    %v282 = vld [vmem:[#allocation6 + $0x410] sm:$0xff]
    %v283 = vld [vmem:[#allocation6 + $0x418] sm:$0xff]
    %v284 = vld [vmem:[#allocation6 + $0x420] sm:$0xff]
    %v285 = vld [vmem:[#allocation6 + $0x428] sm:$0xff]
    %v286 = vld [vmem:[#allocation6 + $0x430] sm:$0xff]
    %v287 = vld [vmem:[#allocation6 + $0x438] sm:$0xff]
    %v288 = vld [vmem:[#allocation6 + $0x440] sm:$0xff]
    %v289 = vld [vmem:[#allocation6 + $0x448] sm:$0xff]
    %v290 = vld [vmem:[#allocation6 + $0x450] sm:$0xff]
    %v291 = vld [vmem:[#allocation6 + $0x458] sm:$0xff]
    %v292 = vld [vmem:[#allocation6 + $0x460] sm:$0xff]
    %v293 = vld [vmem:[#allocation6 + $0x468] sm:$0xff]
    %v294 = vld [vmem:[#allocation6 + $0x470] sm:$0xff]
    %v295 = vld [vmem:[#allocation6 + $0x478] sm:$0xff]
    %v296 = vld [vmem:[#allocation6 + $0x480] sm:$0xff]
    %v297 = vld [vmem:[#allocation6 + $0x488] sm:$0xff]
    %v298 = vld [vmem:[#allocation6 + $0x490] sm:$0xff]
    %v299 = vld [vmem:[#allocation6 + $0x498] sm:$0xff]
    %v300 = vld [vmem:[#allocation6 + $0x4a0] sm:$0xff]
    %v301 = vld [vmem:[#allocation6 + $0x4a8] sm:$0xff]
    %v302 = vld [vmem:[#allocation6 + $0x4b0] sm:$0xff]
    %v303 = vld [vmem:[#allocation6 + $0x4b8] sm:$0xff]
    %v304 = vld [vmem:[#allocation6 + $0x4c0] sm:$0xff]
    %v305 = vld [vmem:[#allocation6 + $0x4c8] sm:$0xff]
    %v306 = vld [vmem:[#allocation6 + $0x4d0] sm:$0xff]
    %v307 = vld [vmem:[#allocation6 + $0x4d8] sm:$0xff]
    %v308 = vld [vmem:[#allocation6 + $0x4e0] sm:$0xff]
    %v309 = vld [vmem:[#allocation6 + $0x4e8] sm:$0xff]
    %v310 = vld [vmem:[#allocation6 + $0x4f0] sm:$0xff]
    %v311 = vld [vmem:[#allocation6 + $0x4f8] sm:$0xff]
    %v312 = vld [vmem:[#allocation6 + $0x500] sm:$0xff]
    %v313 = vld [vmem:[#allocation6 + $0x508] sm:$0xff]
    %v314 = vld [vmem:[#allocation6 + $0x510] sm:$0xff]
    %v315 = vld [vmem:[#allocation6 + $0x518] sm:$0xff]
    %v316 = vld [vmem:[#allocation6 + $0x520] sm:$0xff]
    %v317 = vld [vmem:[#allocation6 + $0x528] sm:$0xff]
    %v318 = vld [vmem:[#allocation6 + $0x530] sm:$0xff]
    %v319 = vld [vmem:[#allocation6 + $0x538] sm:$0xff]
    %v320 = vld [vmem:[#allocation6 + $0x540] sm:$0xff]
    %v321 = vld [vmem:[#allocation6 + $0x548] sm:$0xff]
    %v322 = vld [vmem:[#allocation6 + $0x550] sm:$0xff]
    %v323 = vld [vmem:[#allocation6 + $0x558] sm:$0xff]
    %v324 = vld [vmem:[#allocation6 + $0x560] sm:$0xff]
    %v325 = vld [vmem:[#allocation6 + $0x568] sm:$0xff]
    %v326 = vld [vmem:[#allocation6 + $0x570] sm:$0xff]
    %v327 = vld [vmem:[#allocation6 + $0x578] sm:$0xff]
    %v328 = vld [vmem:[#allocation6 + $0x580] sm:$0xff]
    %v329 = vld [vmem:[#allocation6 + $0x588] sm:$0xff]
    %v330 = vld [vmem:[#allocation6 + $0x590] sm:$0xff]
    %v331 = vld [vmem:[#allocation6 + $0x598] sm:$0xff]
    %v332 = vld [vmem:[#allocation6 + $0x5a0] sm:$0xff]
    %v333 = vld [vmem:[#allocation6 + $0x5a8] sm:$0xff]
    %v334 = vld [vmem:[#allocation6 + $0x5b0] sm:$0xff]
    %v335 = vld [vmem:[#allocation6 + $0x5b8] sm:$0xff]
    %v336 = vld [vmem:[#allocation6 + $0x5c0] sm:$0xff]
    %v337 = vld [vmem:[#allocation6 + $0x5c8] sm:$0xff]
    %v338 = vld [vmem:[#allocation6 + $0x5d0] sm:$0xff]
    %v339 = vld [vmem:[#allocation6 + $0x5d8] sm:$0xff]
    %v340 = vld [vmem:[#allocation6 + $0x5e0] sm:$0xff]
    %v341 = vld [vmem:[#allocation6 + $0x5e8] sm:$0xff]
    %v342 = vld [vmem:[#allocation6 + $0x5f0] sm:$0xff]
    %v343 = vld [vmem:[#allocation6 + $0x5f8] sm:$0xff]
    %v344 = vld [vmem:[#allocation6 + $0x600] sm:$0xff]
    %v345 = vld [vmem:[#allocation6 + $0x608] sm:$0xff]
    %v346 = vld [vmem:[#allocation6 + $0x610] sm:$0xff]
    %v347 = vld [vmem:[#allocation6 + $0x618] sm:$0xff]
    %v348 = vld [vmem:[#allocation6 + $0x620] sm:$0xff]
    %v349 = vld [vmem:[#allocation6 + $0x628] sm:$0xff]
    %v350 = vld [vmem:[#allocation6 + $0x630] sm:$0xff]
    %v351 = vld [vmem:[#allocation6 + $0x638] sm:$0xff]
    %v352 = vld [vmem:[#allocation6 + $0x640] sm:$0xff]
    %v353 = vld [vmem:[#allocation6 + $0x648] sm:$0xff]
    %v354 = vld [vmem:[#allocation6 + $0x650] sm:$0xff]
    %v355 = vld [vmem:[#allocation6 + $0x658] sm:$0xff]
    %v356 = vld [vmem:[#allocation6 + $0x660] sm:$0xff]
    %v357 = vld [vmem:[#allocation6 + $0x668] sm:$0xff]
    %v358 = vld [vmem:[#allocation6 + $0x670] sm:$0xff]
    %v359 = vld [vmem:[#allocation6 + $0x678] sm:$0xff]
    %v360 = vld [vmem:[#allocation6 + $0x680] sm:$0xff]
    %v361 = vld [vmem:[#allocation6 + $0x688] sm:$0xff]
    %v362 = vld [vmem:[#allocation6 + $0x690] sm:$0xff]
    %v363 = vld [vmem:[#allocation6 + $0x698] sm:$0xff]
    %v364 = vld [vmem:[#allocation6 + $0x6a0] sm:$0xff]
    %v365 = vld [vmem:[#allocation6 + $0x6a8] sm:$0xff]
    %v366 = vld [vmem:[#allocation6 + $0x6b0] sm:$0xff]
    %v367 = vld [vmem:[#allocation6 + $0x6b8] sm:$0xff]
    %v368 = vld [vmem:[#allocation6 + $0x6c0] sm:$0xff]
    %v369 = vld [vmem:[#allocation6 + $0x6c8] sm:$0xff]
    %v370 = vld [vmem:[#allocation6 + $0x6d0] sm:$0xff]
    %v371 = vld [vmem:[#allocation6 + $0x6d8] sm:$0xff]
    %v372 = vld [vmem:[#allocation6 + $0x6e0] sm:$0xff]
    %v373 = vld [vmem:[#allocation6 + $0x6e8] sm:$0xff]
    %v374 = vld [vmem:[#allocation6 + $0x6f0] sm:$0xff]
    %v375 = vld [vmem:[#allocation6 + $0x6f8] sm:$0xff]
    %v376 = vld [vmem:[#allocation6 + $0x700] sm:$0xff]
    %v377 = vld [vmem:[#allocation6 + $0x708] sm:$0xff]
    %v378 = vld [vmem:[#allocation6 + $0x710] sm:$0xff]
    %v379 = vld [vmem:[#allocation6 + $0x718] sm:$0xff]
    %v380 = vld [vmem:[#allocation6 + $0x720] sm:$0xff]
    %v381 = vld [vmem:[#allocation6 + $0x728] sm:$0xff]
    %v382 = vld [vmem:[#allocation6 + $0x730] sm:$0xff]
    %v383 = vld [vmem:[#allocation6 + $0x738] sm:$0xff]
    %v384 = vld [vmem:[#allocation6 + $0x740] sm:$0xff]
    %v385 = vld [vmem:[#allocation6 + $0x748] sm:$0xff]
    %v386 = vld [vmem:[#allocation6 + $0x750] sm:$0xff]
    %v387 = vld [vmem:[#allocation6 + $0x758] sm:$0xff]
    %v388 = vld [vmem:[#allocation6 + $0x760] sm:$0xff]
    %v389 = vld [vmem:[#allocation6 + $0x768] sm:$0xff]
    %v390 = vld [vmem:[#allocation6 + $0x770] sm:$0xff]
    %v391 = vld [vmem:[#allocation6 + $0x778] sm:$0xff]
    %v392 = vld [vmem:[#allocation6 + $0x780] sm:$0xff]
    %v393 = vld [vmem:[#allocation6 + $0x788] sm:$0xff]
    %v394 = vld [vmem:[#allocation6 + $0x790] sm:$0xff]
    %v395 = vld [vmem:[#allocation6 + $0x798] sm:$0xff]
    %v396 = vld [vmem:[#allocation6 + $0x7a0] sm:$0xff]
    %v397 = vld [vmem:[#allocation6 + $0x7a8] sm:$0xff]
    %v398 = vld [vmem:[#allocation6 + $0x7b0] sm:$0xff]
    %v399 = vld [vmem:[#allocation6 + $0x7b8] sm:$0xff]
    %v400 = vld [vmem:[#allocation6 + $0x7c0] sm:$0xff]
    %v401 = vld [vmem:[#allocation6 + $0x7c8] sm:$0xff]
    %v402 = vld [vmem:[#allocation6 + $0x7d0] sm:$0xff]
    %v403 = vld [vmem:[#allocation6 + $0x7d8] sm:$0xff]
    %v404 = vld [vmem:[#allocation6 + $0x7e0] sm:$0xff]
    %v405 = vld [vmem:[#allocation6 + $0x7e8] sm:$0xff]
    %v406 = vld [vmem:[#allocation6 + $0x7f0] sm:$0xff]
    %v407 = vld [vmem:[#allocation6 + $0x7f8] sm:$0xff]
    %v408 = vld [vmem:[#allocation6 + $0x800] sm:$0xff]
    %v409 = vld [vmem:[#allocation6 + $0x808] sm:$0xff]
    %v410 = vld [vmem:[#allocation6 + $0x810] sm:$0xff]
    %v411 = vld [vmem:[#allocation6 + $0x818] sm:$0xff]
    %v412 = vld [vmem:[#allocation6 + $0x820] sm:$0xff]
    %v413 = vld [vmem:[#allocation6 + $0x828] sm:$0xff]
    %v414 = vld [vmem:[#allocation6 + $0x830] sm:$0xff]
    %v415 = vld [vmem:[#allocation6 + $0x838] sm:$0xff]
    %v416 = vld [vmem:[#allocation6 + $0x840] sm:$0xff]
    %v417 = vld [vmem:[#allocation6 + $0x848] sm:$0xff]
    %v418 = vld [vmem:[#allocation6 + $0x850] sm:$0xff]
    %v419 = vld [vmem:[#allocation6 + $0x858] sm:$0xff]
    %v420 = vld [vmem:[#allocation6 + $0x860] sm:$0xff]
    %v421 = vld [vmem:[#allocation6 + $0x868] sm:$0xff]
    %v422 = vld [vmem:[#allocation6 + $0x870] sm:$0xff]
    %v423 = vld [vmem:[#allocation6 + $0x878] sm:$0xff]
    %v424 = vld [vmem:[#allocation6 + $0x880] sm:$0xff]
    %v425 = vld [vmem:[#allocation6 + $0x888] sm:$0xff]
    %v426 = vld [vmem:[#allocation6 + $0x890] sm:$0xff]
    %v427 = vld [vmem:[#allocation6 + $0x898] sm:$0xff]
    %v428 = vld [vmem:[#allocation6 + $0x8a0] sm:$0xff]
    %v429 = vld [vmem:[#allocation6 + $0x8a8] sm:$0xff]
    %v430 = vld [vmem:[#allocation6 + $0x8b0] sm:$0xff]
    %v431 = vld [vmem:[#allocation6 + $0x8b8] sm:$0xff]
    %v432 = vld [vmem:[#allocation6 + $0x8c0] sm:$0xff]
    %v433 = vld [vmem:[#allocation6 + $0x8c8] sm:$0xff]
    %v434 = vld [vmem:[#allocation6 + $0x8d0] sm:$0xff]
    %v435 = vld [vmem:[#allocation6 + $0x8d8] sm:$0xff]
    %v436 = vld [vmem:[#allocation6 + $0x8e0] sm:$0xff]
    %v437 = vld [vmem:[#allocation6 + $0x8e8] sm:$0xff]
    %v438 = vld [vmem:[#allocation6 + $0x8f0] sm:$0xff]
    %v439 = vld [vmem:[#allocation6 + $0x8f8] sm:$0xff]
    %v512 = vunpack.c.l.b16 %v80
    %v513 = vunpack.c.h.b16 %v80
    %v514 = vunpack.c.l.b16 %v81
    %v515 = vunpack.c.h.b16 %v81
    %v516 = vunpack.c.l.b16 %v82
    %v517 = vunpack.c.h.b16 %v82
    %v518 = vunpack.c.l.b16 %v83
    %v519 = vunpack.c.h.b16 %v83
    %v520 = vunpack.c.l.b16 %v84
    %v521 = vunpack.c.h.b16 %v84
    %v522 = vunpack.c.l.b16 %v85
    %v523 = vunpack.c.h.b16 %v85
    %v524 = vunpack.c.l.b16 %v86
    %v525 = vunpack.c.h.b16 %v86
    %v526 = vunpack.c.l.b16 %v87
    %v527 = vunpack.c.h.b16 %v87
    %v528 = vunpack.c.l.b16 %v88
    %v529 = vunpack.c.h.b16 %v88
    %v530 = vunpack.c.l.b16 %v89
    %v531 = vunpack.c.h.b16 %v89
    %v532 = vunpack.c.l.b16 %v90
    %v533 = vunpack.c.h.b16 %v90
    %v534 = vunpack.c.l.b16 %v91
    %v535 = vunpack.c.h.b16 %v91
    %v536 = vunpack.c.l.b16 %v92
    %v537 = vunpack.c.h.b16 %v92
    %v538 = vunpack.c.l.b16 %v93
    %v539 = vunpack.c.h.b16 %v93
    %v540 = vunpack.c.l.b16 %v94
    %v541 = vunpack.c.h.b16 %v94
    %v542 = vunpack.c.l.b16 %v95
    %v543 = vunpack.c.h.b16 %v95
    %v544 = vunpack.c.l.b16 %v96
    %v545 = vunpack.c.h.b16 %v96
    %v546 = vunpack.c.l.b16 %v97
    %v547 = vunpack.c.h.b16 %v97
    %v548 = vunpack.c.l.b16 %v98
    %v549 = vunpack.c.h.b16 %v98
    %v550 = vunpack.c.l.b16 %v99
    %v551 = vunpack.c.h.b16 %v99
    %v552 = vunpack.c.l.b16 %v100
    %v553 = vunpack.c.h.b16 %v100
    %v554 = vunpack.c.l.b16 %v101
    %v555 = vunpack.c.h.b16 %v101
    %v556 = vunpack.c.l.b16 %v102
    %v557 = vunpack.c.h.b16 %v102
    %v558 = vunpack.c.l.b16 %v103
    %v559 = vunpack.c.h.b16 %v103
    %v560 = vunpack.c.l.b16 %v104
    %v561 = vunpack.c.h.b16 %v104
    %v562 = vunpack.c.l.b16 %v105
    %v563 = vunpack.c.h.b16 %v105
    %v564 = vunpack.c.l.b16 %v106
    %v565 = vunpack.c.h.b16 %v106
    %v566 = vunpack.c.l.b16 %v107
    %v567 = vunpack.c.h.b16 %v107
    %v568 = vunpack.c.l.b16 %v108
    %v569 = vunpack.c.h.b16 %v108
    %v570 = vunpack.c.l.b16 %v109
    %v571 = vunpack.c.h.b16 %v109
    %v572 = vunpack.c.l.b16 %v110
    %v573 = vunpack.c.h.b16 %v110
    %v574 = vunpack.c.l.b16 %v111
    %v575 = vunpack.c.h.b16 %v111
    %v576 = vunpack.c.l.b16 %v112
    %v577 = vunpack.c.h.b16 %v112
    %v578 = vunpack.c.l.b16 %v113
    %v579 = vunpack.c.h.b16 %v113
    %v580 = vunpack.c.l.b16 %v114
    %v581 = vunpack.c.h.b16 %v114
    %v582 = vunpack.c.l.b16 %v115
    %v583 = vunpack.c.h.b16 %v115
    %v584 = vunpack.c.l.b16 %v116
    %v585 = vunpack.c.h.b16 %v116
    %v586 = vunpack.c.l.b16 %v117
    %v587 = vunpack.c.h.b16 %v117
    %v588 = vunpack.c.l.b16 %v118
    %v589 = vunpack.c.h.b16 %v118
    %v590 = vunpack.c.l.b16 %v119
    %v591 = vunpack.c.h.b16 %v119
    %v592 = vunpack.c.l.b16 %v120
    %v593 = vunpack.c.h.b16 %v120
    %v594 = vunpack.c.l.b16 %v121
    %v595 = vunpack.c.h.b16 %v121
    %v596 = vunpack.c.l.b16 %v122
    %v597 = vunpack.c.h.b16 %v122
    %v598 = vunpack.c.l.b16 %v123
    %v599 = vunpack.c.h.b16 %v123
    %v600 = vunpack.c.l.b16 %v124
    %v601 = vunpack.c.h.b16 %v124
    %v602 = vunpack.c.l.b16 %v125
    %v603 = vunpack.c.h.b16 %v125
    %v604 = vunpack.c.l.b16 %v126
    %v605 = vunpack.c.h.b16 %v126
    %v606 = vunpack.c.l.b16 %v127
    %v607 = vunpack.c.h.b16 %v127
    %v608 = vunpack.c.l.b16 %v128
    %v609 = vunpack.c.h.b16 %v128
    %v610 = vunpack.c.l.b16 %v129
    %v611 = vunpack.c.h.b16 %v129
    %v612 = vunpack.c.l.b16 %v130
    %v613 = vunpack.c.h.b16 %v130
    %v614 = vunpack.c.l.b16 %v131
    %v615 = vunpack.c.h.b16 %v131
    %v616 = vunpack.c.l.b16 %v132
    %v617 = vunpack.c.h.b16 %v132
    %v618 = vunpack.c.l.b16 %v133
    %v619 = vunpack.c.h.b16 %v133
    %v620 = vunpack.c.l.b16 %v134
    %v621 = vunpack.c.h.b16 %v134
    %v622 = vunpack.c.l.b16 %v135
    %v623 = vunpack.c.h.b16 %v135
    %v624 = vunpack.c.l.b16 %v136
    %v625 = vunpack.c.h.b16 %v136
    %v626 = vunpack.c.l.b16 %v137
    %v627 = vunpack.c.h.b16 %v137
    %v628 = vunpack.c.l.b16 %v138
    %v629 = vunpack.c.h.b16 %v138
    %v630 = vunpack.c.l.b16 %v139
    %v631 = vunpack.c.h.b16 %v139
    %v632 = vunpack.c.l.b16 %v140
    %v633 = vunpack.c.h.b16 %v140
    %v634 = vunpack.c.l.b16 %v141
    %v635 = vunpack.c.h.b16 %v141
    %v636 = vunpack.c.l.b16 %v142
    %v637 = vunpack.c.h.b16 %v142
    %v638 = vunpack.c.l.b16 %v143
    %v639 = vunpack.c.h.b16 %v143
    %v640 = vunpack.c.l.b16 %v144
    %v641 = vunpack.c.h.b16 %v144
    %v642 = vunpack.c.l.b16 %v145
    %v643 = vunpack.c.h.b16 %v145
    %v644 = vunpack.c.l.b16 %v146
    %v645 = vunpack.c.h.b16 %v146
    %v646 = vunpack.c.l.b16 %v147
    %v647 = vunpack.c.h.b16 %v147
    %v648 = vunpack.c.l.b16 %v148
    %v649 = vunpack.c.h.b16 %v148
    %v650 = vunpack.c.l.b16 %v149
    %v651 = vunpack.c.h.b16 %v149
    %v652 = vunpack.c.l.b16 %v150
    %v653 = vunpack.c.h.b16 %v150
    %v654 = vunpack.c.l.b16 %v151
    %v655 = vunpack.c.h.b16 %v151
    %v656 = vpack.c.b16 %v530, %v512
    %v657 = vpack.c.b16 %v531, %v513
    %v658 = vpack.c.b16 %v532, %v514
    %v659 = vpack.c.b16 %v533, %v515
    %v660 = vpack.c.b16 %v534, %v516
    %v661 = vpack.c.b16 %v535, %v517
    %v662 = vpack.c.b16 %v536, %v518
    %v663 = vpack.c.b16 %v537, %v519
    %v664 = vpack.c.b16 %v538, %v520
    %v665 = vpack.c.b16 %v539, %v521
    %v666 = vpack.c.b16 %v540, %v522
    %v667 = vpack.c.b16 %v541, %v523
    %v668 = vpack.c.b16 %v542, %v524
    %v669 = vpack.c.b16 %v543, %v525
    %v670 = vpack.c.b16 %v544, %v526
    %v671 = vpack.c.b16 %v545, %v527
    %v672 = vpack.c.b16 %v546, %v528
    %v673 = vpack.c.b16 %v547, %v529
    %v674 = vpack.c.b16 %v566, %v548
    %v675 = vpack.c.b16 %v567, %v549
    %v676 = vpack.c.b16 %v568, %v550
    %v677 = vpack.c.b16 %v569, %v551
    %v678 = vpack.c.b16 %v570, %v552
    %v679 = vpack.c.b16 %v571, %v553
    %v680 = vpack.c.b16 %v572, %v554
    %v681 = vpack.c.b16 %v573, %v555
    %v682 = vpack.c.b16 %v574, %v556
    %v683 = vpack.c.b16 %v575, %v557
    %v684 = vpack.c.b16 %v576, %v558
    %v685 = vpack.c.b16 %v577, %v559
    %v686 = vpack.c.b16 %v578, %v560
    %v687 = vpack.c.b16 %v579, %v561
    %v688 = vpack.c.b16 %v580, %v562
    %v689 = vpack.c.b16 %v581, %v563
    %v690 = vpack.c.b16 %v582, %v564
    %v691 = vpack.c.b16 %v583, %v565
    %v692 = vpack.c.b16 %v602, %v584
    %v693 = vpack.c.b16 %v603, %v585
    %v694 = vpack.c.b16 %v604, %v586
    %v695 = vpack.c.b16 %v605, %v587
    %v696 = vpack.c.b16 %v606, %v588
    %v697 = vpack.c.b16 %v607, %v589
    %v698 = vpack.c.b16 %v608, %v590
    %v699 = vpack.c.b16 %v609, %v591
    %v700 = vpack.c.b16 %v610, %v592
    %v701 = vpack.c.b16 %v611, %v593
    %v702 = vpack.c.b16 %v612, %v594
    %v703 = vpack.c.b16 %v613, %v595
    %v704 = vpack.c.b16 %v614, %v596
    %v705 = vpack.c.b16 %v615, %v597
    %v706 = vpack.c.b16 %v616, %v598
    %v707 = vpack.c.b16 %v617, %v599
    %v708 = vpack.c.b16 %v618, %v600
    %v709 = vpack.c.b16 %v619, %v601
    %v710 = vpack.c.b16 %v638, %v620
    %v711 = vpack.c.b16 %v639, %v621
    %v712 = vpack.c.b16 %v640, %v622
    %v713 = vpack.c.b16 %v641, %v623
    %v714 = vpack.c.b16 %v642, %v624
    %v715 = vpack.c.b16 %v643, %v625
    %v716 = vpack.c.b16 %v644, %v626
    %v717 = vpack.c.b16 %v645, %v627
    %v718 = vpack.c.b16 %v646, %v628
    %v719 = vpack.c.b16 %v647, %v629
    %v720 = vpack.c.b16 %v648, %v630
    %v721 = vpack.c.b16 %v649, %v631
    %v722 = vpack.c.b16 %v650, %v632
    %v723 = vpack.c.b16 %v651, %v633
    %v724 = vpack.c.b16 %v652, %v634
    %v725 = vpack.c.b16 %v653, %v635
    %v726 = vpack.c.b16 %v654, %v636
    %v727 = vpack.c.b16 %v655, %v637
    %v1088 = vunpack.c.l.b16 %v152
    %v1089 = vunpack.c.h.b16 %v152
    %v1090 = vunpack.c.l.b16 %v153
    %v1091 = vunpack.c.h.b16 %v153
    %v1092 = vunpack.c.l.b16 %v154
    %v1093 = vunpack.c.h.b16 %v154
    %v1094 = vunpack.c.l.b16 %v155
    %v1095 = vunpack.c.h.b16 %v155
    %v1096 = vunpack.c.l.b16 %v156
    %v1097 = vunpack.c.h.b16 %v156
    %v1098 = vunpack.c.l.b16 %v157
    %v1099 = vunpack.c.h.b16 %v157
    %v1100 = vunpack.c.l.b16 %v158
    %v1101 = vunpack.c.h.b16 %v158
    %v1102 = vunpack.c.l.b16 %v159
    %v1103 = vunpack.c.h.b16 %v159
    %v1104 = vunpack.c.l.b16 %v160
    %v1105 = vunpack.c.h.b16 %v160
    %v1106 = vunpack.c.l.b16 %v161
    %v1107 = vunpack.c.h.b16 %v161
    %v1108 = vunpack.c.l.b16 %v162
    %v1109 = vunpack.c.h.b16 %v162
    %v1110 = vunpack.c.l.b16 %v163
    %v1111 = vunpack.c.h.b16 %v163
    %v1112 = vunpack.c.l.b16 %v164
    %v1113 = vunpack.c.h.b16 %v164
    %v1114 = vunpack.c.l.b16 %v165
    %v1115 = vunpack.c.h.b16 %v165
    %v1116 = vunpack.c.l.b16 %v166
    %v1117 = vunpack.c.h.b16 %v166
    %v1118 = vunpack.c.l.b16 %v167
    %v1119 = vunpack.c.h.b16 %v167
    %v1120 = vunpack.c.l.b16 %v168
    %v1121 = vunpack.c.h.b16 %v168
    %v1122 = vunpack.c.l.b16 %v169
    %v1123 = vunpack.c.h.b16 %v169
    %v1124 = vunpack.c.l.b16 %v170
    %v1125 = vunpack.c.h.b16 %v170
    %v1126 = vunpack.c.l.b16 %v171
    %v1127 = vunpack.c.h.b16 %v171
    %v1128 = vunpack.c.l.b16 %v172
    %v1129 = vunpack.c.h.b16 %v172
    %v1130 = vunpack.c.l.b16 %v173
    %v1131 = vunpack.c.h.b16 %v173
    %v1132 = vunpack.c.l.b16 %v174
    %v1133 = vunpack.c.h.b16 %v174
    %v1134 = vunpack.c.l.b16 %v175
    %v1135 = vunpack.c.h.b16 %v175
    %v1136 = vunpack.c.l.b16 %v176
    %v1137 = vunpack.c.h.b16 %v176
    %v1138 = vunpack.c.l.b16 %v177
    %v1139 = vunpack.c.h.b16 %v177
    %v1140 = vunpack.c.l.b16 %v178
    %v1141 = vunpack.c.h.b16 %v178
    %v1142 = vunpack.c.l.b16 %v179
    %v1143 = vunpack.c.h.b16 %v179
    %v1144 = vunpack.c.l.b16 %v180
    %v1145 = vunpack.c.h.b16 %v180
    %v1146 = vunpack.c.l.b16 %v181
    %v1147 = vunpack.c.h.b16 %v181
    %v1148 = vunpack.c.l.b16 %v182
    %v1149 = vunpack.c.h.b16 %v182
    %v1150 = vunpack.c.l.b16 %v183
    %v1151 = vunpack.c.h.b16 %v183
    %v1152 = vunpack.c.l.b16 %v184
    %v1153 = vunpack.c.h.b16 %v184
    %v1154 = vunpack.c.l.b16 %v185
    %v1155 = vunpack.c.h.b16 %v185
    %v1156 = vunpack.c.l.b16 %v186
    %v1157 = vunpack.c.h.b16 %v186
    %v1158 = vunpack.c.l.b16 %v187
    %v1159 = vunpack.c.h.b16 %v187
    %v1160 = vunpack.c.l.b16 %v188
    %v1161 = vunpack.c.h.b16 %v188
    %v1162 = vunpack.c.l.b16 %v189
    %v1163 = vunpack.c.h.b16 %v189
    %v1164 = vunpack.c.l.b16 %v190
    %v1165 = vunpack.c.h.b16 %v190
    %v1166 = vunpack.c.l.b16 %v191
    %v1167 = vunpack.c.h.b16 %v191
    %v1168 = vunpack.c.l.b16 %v192
    %v1169 = vunpack.c.h.b16 %v192
    %v1170 = vunpack.c.l.b16 %v193
    %v1171 = vunpack.c.h.b16 %v193
    %v1172 = vunpack.c.l.b16 %v194
    %v1173 = vunpack.c.h.b16 %v194
    %v1174 = vunpack.c.l.b16 %v195
    %v1175 = vunpack.c.h.b16 %v195
    %v1176 = vunpack.c.l.b16 %v196
    %v1177 = vunpack.c.h.b16 %v196
    %v1178 = vunpack.c.l.b16 %v197
    %v1179 = vunpack.c.h.b16 %v197
    %v1180 = vunpack.c.l.b16 %v198
    %v1181 = vunpack.c.h.b16 %v198
    %v1182 = vunpack.c.l.b16 %v199
    %v1183 = vunpack.c.h.b16 %v199
    %v1184 = vunpack.c.l.b16 %v200
    %v1185 = vunpack.c.h.b16 %v200
    %v1186 = vunpack.c.l.b16 %v201
    %v1187 = vunpack.c.h.b16 %v201
    %v1188 = vunpack.c.l.b16 %v202
    %v1189 = vunpack.c.h.b16 %v202
    %v1190 = vunpack.c.l.b16 %v203
    %v1191 = vunpack.c.h.b16 %v203
    %v1192 = vunpack.c.l.b16 %v204
    %v1193 = vunpack.c.h.b16 %v204
    %v1194 = vunpack.c.l.b16 %v205
    %v1195 = vunpack.c.h.b16 %v205
    %v1196 = vunpack.c.l.b16 %v206
    %v1197 = vunpack.c.h.b16 %v206
    %v1198 = vunpack.c.l.b16 %v207
    %v1199 = vunpack.c.h.b16 %v207
    %v1200 = vunpack.c.l.b16 %v208
    %v1201 = vunpack.c.h.b16 %v208
    %v1202 = vunpack.c.l.b16 %v209
    %v1203 = vunpack.c.h.b16 %v209
    %v1204 = vunpack.c.l.b16 %v210
    %v1205 = vunpack.c.h.b16 %v210
    %v1206 = vunpack.c.l.b16 %v211
    %v1207 = vunpack.c.h.b16 %v211
    %v1208 = vunpack.c.l.b16 %v212
    %v1209 = vunpack.c.h.b16 %v212
    %v1210 = vunpack.c.l.b16 %v213
    %v1211 = vunpack.c.h.b16 %v213
    %v1212 = vunpack.c.l.b16 %v214
    %v1213 = vunpack.c.h.b16 %v214
    %v1214 = vunpack.c.l.b16 %v215
    %v1215 = vunpack.c.h.b16 %v215
    %v1216 = vunpack.c.l.b16 %v216
    %v1217 = vunpack.c.h.b16 %v216
    %v1218 = vunpack.c.l.b16 %v217
    %v1219 = vunpack.c.h.b16 %v217
    %v1220 = vunpack.c.l.b16 %v218
    %v1221 = vunpack.c.h.b16 %v218
    %v1222 = vunpack.c.l.b16 %v219
    %v1223 = vunpack.c.h.b16 %v219
    %v1224 = vunpack.c.l.b16 %v220
    %v1225 = vunpack.c.h.b16 %v220
    %v1226 = vunpack.c.l.b16 %v221
    %v1227 = vunpack.c.h.b16 %v221
    %v1228 = vunpack.c.l.b16 %v222
    %v1229 = vunpack.c.h.b16 %v222
    %v1230 = vunpack.c.l.b16 %v223
    %v1231 = vunpack.c.h.b16 %v223
    %v1232 = vunpack.c.l.b16 %v224
    %v1233 = vunpack.c.h.b16 %v224
    %v1234 = vunpack.c.l.b16 %v225
    %v1235 = vunpack.c.h.b16 %v225
    %v1236 = vunpack.c.l.b16 %v226
    %v1237 = vunpack.c.h.b16 %v226
    %v1238 = vunpack.c.l.b16 %v227
    %v1239 = vunpack.c.h.b16 %v227
    %v1240 = vunpack.c.l.b16 %v228
    %v1241 = vunpack.c.h.b16 %v228
    %v1242 = vunpack.c.l.b16 %v229
    %v1243 = vunpack.c.h.b16 %v229
    %v1244 = vunpack.c.l.b16 %v230
    %v1245 = vunpack.c.h.b16 %v230
    %v1246 = vunpack.c.l.b16 %v231
    %v1247 = vunpack.c.h.b16 %v231
    %v1248 = vunpack.c.l.b16 %v232
    %v1249 = vunpack.c.h.b16 %v232
    %v1250 = vunpack.c.l.b16 %v233
    %v1251 = vunpack.c.h.b16 %v233
    %v1252 = vunpack.c.l.b16 %v234
    %v1253 = vunpack.c.h.b16 %v234
    %v1254 = vunpack.c.l.b16 %v235
    %v1255 = vunpack.c.h.b16 %v235
    %v1256 = vunpack.c.l.b16 %v236
    %v1257 = vunpack.c.h.b16 %v236
    %v1258 = vunpack.c.l.b16 %v237
    %v1259 = vunpack.c.h.b16 %v237
    %v1260 = vunpack.c.l.b16 %v238
    %v1261 = vunpack.c.h.b16 %v238
    %v1262 = vunpack.c.l.b16 %v239
    %v1263 = vunpack.c.h.b16 %v239
    %v1264 = vunpack.c.l.b16 %v240
    %v1265 = vunpack.c.h.b16 %v240
    %v1266 = vunpack.c.l.b16 %v241
    %v1267 = vunpack.c.h.b16 %v241
    %v1268 = vunpack.c.l.b16 %v242
    %v1269 = vunpack.c.h.b16 %v242
    %v1270 = vunpack.c.l.b16 %v243
    %v1271 = vunpack.c.h.b16 %v243
    %v1272 = vunpack.c.l.b16 %v244
    %v1273 = vunpack.c.h.b16 %v244
    %v1274 = vunpack.c.l.b16 %v245
    %v1275 = vunpack.c.h.b16 %v245
    %v1276 = vunpack.c.l.b16 %v246
    %v1277 = vunpack.c.h.b16 %v246
    %v1278 = vunpack.c.l.b16 %v247
    %v1279 = vunpack.c.h.b16 %v247
    %v1280 = vunpack.c.l.b16 %v248
    %v1281 = vunpack.c.h.b16 %v248
    %v1282 = vunpack.c.l.b16 %v249
    %v1283 = vunpack.c.h.b16 %v249
    %v1284 = vunpack.c.l.b16 %v250
    %v1285 = vunpack.c.h.b16 %v250
    %v1286 = vunpack.c.l.b16 %v251
    %v1287 = vunpack.c.h.b16 %v251
    %v1288 = vunpack.c.l.b16 %v252
    %v1289 = vunpack.c.h.b16 %v252
    %v1290 = vunpack.c.l.b16 %v253
    %v1291 = vunpack.c.h.b16 %v253
    %v1292 = vunpack.c.l.b16 %v254
    %v1293 = vunpack.c.h.b16 %v254
    %v1294 = vunpack.c.l.b16 %v255
    %v1295 = vunpack.c.h.b16 %v255
    %v1296 = vunpack.c.l.b16 %v256
    %v1297 = vunpack.c.h.b16 %v256
    %v1298 = vunpack.c.l.b16 %v257
    %v1299 = vunpack.c.h.b16 %v257
    %v1300 = vunpack.c.l.b16 %v258
    %v1301 = vunpack.c.h.b16 %v258
    %v1302 = vunpack.c.l.b16 %v259
    %v1303 = vunpack.c.h.b16 %v259
    %v1304 = vunpack.c.l.b16 %v260
    %v1305 = vunpack.c.h.b16 %v260
    %v1306 = vunpack.c.l.b16 %v261
    %v1307 = vunpack.c.h.b16 %v261
    %v1308 = vunpack.c.l.b16 %v262
    %v1309 = vunpack.c.h.b16 %v262
    %v1310 = vunpack.c.l.b16 %v263
    %v1311 = vunpack.c.h.b16 %v263
    %v1312 = vunpack.c.l.b16 %v264
    %v1313 = vunpack.c.h.b16 %v264
    %v1314 = vunpack.c.l.b16 %v265
    %v1315 = vunpack.c.h.b16 %v265
    %v1316 = vunpack.c.l.b16 %v266
    %v1317 = vunpack.c.h.b16 %v266
    %v1318 = vunpack.c.l.b16 %v267
    %v1319 = vunpack.c.h.b16 %v267
    %v1320 = vunpack.c.l.b16 %v268
    %v1321 = vunpack.c.h.b16 %v268
    %v1322 = vunpack.c.l.b16 %v269
    %v1323 = vunpack.c.h.b16 %v269
    %v1324 = vunpack.c.l.b16 %v270
    %v1325 = vunpack.c.h.b16 %v270
    %v1326 = vunpack.c.l.b16 %v271
    %v1327 = vunpack.c.h.b16 %v271
    %v1328 = vunpack.c.l.b16 %v272
    %v1329 = vunpack.c.h.b16 %v272
    %v1330 = vunpack.c.l.b16 %v273
    %v1331 = vunpack.c.h.b16 %v273
    %v1332 = vunpack.c.l.b16 %v274
    %v1333 = vunpack.c.h.b16 %v274
    %v1334 = vunpack.c.l.b16 %v275
    %v1335 = vunpack.c.h.b16 %v275
    %v1336 = vunpack.c.l.b16 %v276
    %v1337 = vunpack.c.h.b16 %v276
    %v1338 = vunpack.c.l.b16 %v277
    %v1339 = vunpack.c.h.b16 %v277
    %v1340 = vunpack.c.l.b16 %v278
    %v1341 = vunpack.c.h.b16 %v278
    %v1342 = vunpack.c.l.b16 %v279
    %v1343 = vunpack.c.h.b16 %v279
    %v1344 = vunpack.c.l.b16 %v280
    %v1345 = vunpack.c.h.b16 %v280
    %v1346 = vunpack.c.l.b16 %v281
    %v1347 = vunpack.c.h.b16 %v281
    %v1348 = vunpack.c.l.b16 %v282
    %v1349 = vunpack.c.h.b16 %v282
    %v1350 = vunpack.c.l.b16 %v283
    %v1351 = vunpack.c.h.b16 %v283
    %v1352 = vunpack.c.l.b16 %v284
    %v1353 = vunpack.c.h.b16 %v284
    %v1354 = vunpack.c.l.b16 %v285
    %v1355 = vunpack.c.h.b16 %v285
    %v1356 = vunpack.c.l.b16 %v286
    %v1357 = vunpack.c.h.b16 %v286
    %v1358 = vunpack.c.l.b16 %v287
    %v1359 = vunpack.c.h.b16 %v287
    %v1360 = vunpack.c.l.b16 %v288
    %v1361 = vunpack.c.h.b16 %v288
    %v1362 = vunpack.c.l.b16 %v289
    %v1363 = vunpack.c.h.b16 %v289
    %v1364 = vunpack.c.l.b16 %v290
    %v1365 = vunpack.c.h.b16 %v290
    %v1366 = vunpack.c.l.b16 %v291
    %v1367 = vunpack.c.h.b16 %v291
    %v1368 = vunpack.c.l.b16 %v292
    %v1369 = vunpack.c.h.b16 %v292
    %v1370 = vunpack.c.l.b16 %v293
    %v1371 = vunpack.c.h.b16 %v293
    %v1372 = vunpack.c.l.b16 %v294
    %v1373 = vunpack.c.h.b16 %v294
    %v1374 = vunpack.c.l.b16 %v295
    %v1375 = vunpack.c.h.b16 %v295
    %v1376 = vunpack.c.l.b16 %v296
    %v1377 = vunpack.c.h.b16 %v296
    %v1378 = vunpack.c.l.b16 %v297
    %v1379 = vunpack.c.h.b16 %v297
    %v1380 = vunpack.c.l.b16 %v298
    %v1381 = vunpack.c.h.b16 %v298
    %v1382 = vunpack.c.l.b16 %v299
    %v1383 = vunpack.c.h.b16 %v299
    %v1384 = vunpack.c.l.b16 %v300
    %v1385 = vunpack.c.h.b16 %v300
    %v1386 = vunpack.c.l.b16 %v301
    %v1387 = vunpack.c.h.b16 %v301
    %v1388 = vunpack.c.l.b16 %v302
    %v1389 = vunpack.c.h.b16 %v302
    %v1390 = vunpack.c.l.b16 %v303
    %v1391 = vunpack.c.h.b16 %v303
    %v1392 = vunpack.c.l.b16 %v304
    %v1393 = vunpack.c.h.b16 %v304
    %v1394 = vunpack.c.l.b16 %v305
    %v1395 = vunpack.c.h.b16 %v305
    %v1396 = vunpack.c.l.b16 %v306
    %v1397 = vunpack.c.h.b16 %v306
    %v1398 = vunpack.c.l.b16 %v307
    %v1399 = vunpack.c.h.b16 %v307
    %v1400 = vunpack.c.l.b16 %v308
    %v1401 = vunpack.c.h.b16 %v308
    %v1402 = vunpack.c.l.b16 %v309
    %v1403 = vunpack.c.h.b16 %v309
    %v1404 = vunpack.c.l.b16 %v310
    %v1405 = vunpack.c.h.b16 %v310
    %v1406 = vunpack.c.l.b16 %v311
    %v1407 = vunpack.c.h.b16 %v311
    %v1408 = vunpack.c.l.b16 %v312
    %v1409 = vunpack.c.h.b16 %v312
    %v1410 = vunpack.c.l.b16 %v313
    %v1411 = vunpack.c.h.b16 %v313
    %v1412 = vunpack.c.l.b16 %v314
    %v1413 = vunpack.c.h.b16 %v314
    %v1414 = vunpack.c.l.b16 %v315
    %v1415 = vunpack.c.h.b16 %v315
    %v1416 = vunpack.c.l.b16 %v316
    %v1417 = vunpack.c.h.b16 %v316
    %v1418 = vunpack.c.l.b16 %v317
    %v1419 = vunpack.c.h.b16 %v317
    %v1420 = vunpack.c.l.b16 %v318
    %v1421 = vunpack.c.h.b16 %v318
    %v1422 = vunpack.c.l.b16 %v319
    %v1423 = vunpack.c.h.b16 %v319
    %v1424 = vunpack.c.l.b16 %v320
    %v1425 = vunpack.c.h.b16 %v320
    %v1426 = vunpack.c.l.b16 %v321
    %v1427 = vunpack.c.h.b16 %v321
    %v1428 = vunpack.c.l.b16 %v322
    %v1429 = vunpack.c.h.b16 %v322
    %v1430 = vunpack.c.l.b16 %v323
    %v1431 = vunpack.c.h.b16 %v323
    %v1432 = vunpack.c.l.b16 %v324
    %v1433 = vunpack.c.h.b16 %v324
    %v1434 = vunpack.c.l.b16 %v325
    %v1435 = vunpack.c.h.b16 %v325
    %v1436 = vunpack.c.l.b16 %v326
    %v1437 = vunpack.c.h.b16 %v326
    %v1438 = vunpack.c.l.b16 %v327
    %v1439 = vunpack.c.h.b16 %v327
    %v1440 = vunpack.c.l.b16 %v328
    %v1441 = vunpack.c.h.b16 %v328
    %v1442 = vunpack.c.l.b16 %v329
    %v1443 = vunpack.c.h.b16 %v329
    %v1444 = vunpack.c.l.b16 %v330
    %v1445 = vunpack.c.h.b16 %v330
    %v1446 = vunpack.c.l.b16 %v331
    %v1447 = vunpack.c.h.b16 %v331
    %v1448 = vunpack.c.l.b16 %v332
    %v1449 = vunpack.c.h.b16 %v332
    %v1450 = vunpack.c.l.b16 %v333
    %v1451 = vunpack.c.h.b16 %v333
    %v1452 = vunpack.c.l.b16 %v334
    %v1453 = vunpack.c.h.b16 %v334
    %v1454 = vunpack.c.l.b16 %v335
    %v1455 = vunpack.c.h.b16 %v335
    %v1456 = vunpack.c.l.b16 %v336
    %v1457 = vunpack.c.h.b16 %v336
    %v1458 = vunpack.c.l.b16 %v337
    %v1459 = vunpack.c.h.b16 %v337
    %v1460 = vunpack.c.l.b16 %v338
    %v1461 = vunpack.c.h.b16 %v338
    %v1462 = vunpack.c.l.b16 %v339
    %v1463 = vunpack.c.h.b16 %v339
    %v1464 = vunpack.c.l.b16 %v340
    %v1465 = vunpack.c.h.b16 %v340
    %v1466 = vunpack.c.l.b16 %v341
    %v1467 = vunpack.c.h.b16 %v341
    %v1468 = vunpack.c.l.b16 %v342
    %v1469 = vunpack.c.h.b16 %v342
    %v1470 = vunpack.c.l.b16 %v343
    %v1471 = vunpack.c.h.b16 %v343
    %v1472 = vunpack.c.l.b16 %v344
    %v1473 = vunpack.c.h.b16 %v344
    %v1474 = vunpack.c.l.b16 %v345
    %v1475 = vunpack.c.h.b16 %v345
    %v1476 = vunpack.c.l.b16 %v346
    %v1477 = vunpack.c.h.b16 %v346
    %v1478 = vunpack.c.l.b16 %v347
    %v1479 = vunpack.c.h.b16 %v347
    %v1480 = vunpack.c.l.b16 %v348
    %v1481 = vunpack.c.h.b16 %v348
    %v1482 = vunpack.c.l.b16 %v349
    %v1483 = vunpack.c.h.b16 %v349
    %v1484 = vunpack.c.l.b16 %v350
    %v1485 = vunpack.c.h.b16 %v350
    %v1486 = vunpack.c.l.b16 %v351
    %v1487 = vunpack.c.h.b16 %v351
    %v1488 = vunpack.c.l.b16 %v352
    %v1489 = vunpack.c.h.b16 %v352
    %v1490 = vunpack.c.l.b16 %v353
    %v1491 = vunpack.c.h.b16 %v353
    %v1492 = vunpack.c.l.b16 %v354
    %v1493 = vunpack.c.h.b16 %v354
    %v1494 = vunpack.c.l.b16 %v355
    %v1495 = vunpack.c.h.b16 %v355
    %v1496 = vunpack.c.l.b16 %v356
    %v1497 = vunpack.c.h.b16 %v356
    %v1498 = vunpack.c.l.b16 %v357
    %v1499 = vunpack.c.h.b16 %v357
    %v1500 = vunpack.c.l.b16 %v358
    %v1501 = vunpack.c.h.b16 %v358
    %v1502 = vunpack.c.l.b16 %v359
    %v1503 = vunpack.c.h.b16 %v359
    %v1504 = vunpack.c.l.b16 %v360
    %v1505 = vunpack.c.h.b16 %v360
    %v1506 = vunpack.c.l.b16 %v361
    %v1507 = vunpack.c.h.b16 %v361
    %v1508 = vunpack.c.l.b16 %v362
    %v1509 = vunpack.c.h.b16 %v362
    %v1510 = vunpack.c.l.b16 %v363
    %v1511 = vunpack.c.h.b16 %v363
    %v1512 = vunpack.c.l.b16 %v364
    %v1513 = vunpack.c.h.b16 %v364
    %v1514 = vunpack.c.l.b16 %v365
    %v1515 = vunpack.c.h.b16 %v365
    %v1516 = vunpack.c.l.b16 %v366
    %v1517 = vunpack.c.h.b16 %v366
    %v1518 = vunpack.c.l.b16 %v367
    %v1519 = vunpack.c.h.b16 %v367
    %v1520 = vunpack.c.l.b16 %v368
    %v1521 = vunpack.c.h.b16 %v368
    %v1522 = vunpack.c.l.b16 %v369
    %v1523 = vunpack.c.h.b16 %v369
    %v1524 = vunpack.c.l.b16 %v370
    %v1525 = vunpack.c.h.b16 %v370
    %v1526 = vunpack.c.l.b16 %v371
    %v1527 = vunpack.c.h.b16 %v371
    %v1528 = vunpack.c.l.b16 %v372
    %v1529 = vunpack.c.h.b16 %v372
    %v1530 = vunpack.c.l.b16 %v373
    %v1531 = vunpack.c.h.b16 %v373
    %v1532 = vunpack.c.l.b16 %v374
    %v1533 = vunpack.c.h.b16 %v374
    %v1534 = vunpack.c.l.b16 %v375
    %v1535 = vunpack.c.h.b16 %v375
    %v1536 = vunpack.c.l.b16 %v376
    %v1537 = vunpack.c.h.b16 %v376
    %v1538 = vunpack.c.l.b16 %v377
    %v1539 = vunpack.c.h.b16 %v377
    %v1540 = vunpack.c.l.b16 %v378
    %v1541 = vunpack.c.h.b16 %v378
    %v1542 = vunpack.c.l.b16 %v379
    %v1543 = vunpack.c.h.b16 %v379
    %v1544 = vunpack.c.l.b16 %v380
    %v1545 = vunpack.c.h.b16 %v380
    %v1546 = vunpack.c.l.b16 %v381
    %v1547 = vunpack.c.h.b16 %v381
    %v1548 = vunpack.c.l.b16 %v382
    %v1549 = vunpack.c.h.b16 %v382
    %v1550 = vunpack.c.l.b16 %v383
    %v1551 = vunpack.c.h.b16 %v383
    %v1552 = vunpack.c.l.b16 %v384
    %v1553 = vunpack.c.h.b16 %v384
    %v1554 = vunpack.c.l.b16 %v385
    %v1555 = vunpack.c.h.b16 %v385
    %v1556 = vunpack.c.l.b16 %v386
    %v1557 = vunpack.c.h.b16 %v386
    %v1558 = vunpack.c.l.b16 %v387
    %v1559 = vunpack.c.h.b16 %v387
    %v1560 = vunpack.c.l.b16 %v388
    %v1561 = vunpack.c.h.b16 %v388
    %v1562 = vunpack.c.l.b16 %v389
    %v1563 = vunpack.c.h.b16 %v389
    %v1564 = vunpack.c.l.b16 %v390
    %v1565 = vunpack.c.h.b16 %v390
    %v1566 = vunpack.c.l.b16 %v391
    %v1567 = vunpack.c.h.b16 %v391
    %v1568 = vunpack.c.l.b16 %v392
    %v1569 = vunpack.c.h.b16 %v392
    %v1570 = vunpack.c.l.b16 %v393
    %v1571 = vunpack.c.h.b16 %v393
    %v1572 = vunpack.c.l.b16 %v394
    %v1573 = vunpack.c.h.b16 %v394
    %v1574 = vunpack.c.l.b16 %v395
    %v1575 = vunpack.c.h.b16 %v395
    %v1576 = vunpack.c.l.b16 %v396
    %v1577 = vunpack.c.h.b16 %v396
    %v1578 = vunpack.c.l.b16 %v397
    %v1579 = vunpack.c.h.b16 %v397
    %v1580 = vunpack.c.l.b16 %v398
    %v1581 = vunpack.c.h.b16 %v398
    %v1582 = vunpack.c.l.b16 %v399
    %v1583 = vunpack.c.h.b16 %v399
    %v1584 = vunpack.c.l.b16 %v400
    %v1585 = vunpack.c.h.b16 %v400
    %v1586 = vunpack.c.l.b16 %v401
    %v1587 = vunpack.c.h.b16 %v401
    %v1588 = vunpack.c.l.b16 %v402
    %v1589 = vunpack.c.h.b16 %v402
    %v1590 = vunpack.c.l.b16 %v403
    %v1591 = vunpack.c.h.b16 %v403
    %v1592 = vunpack.c.l.b16 %v404
    %v1593 = vunpack.c.h.b16 %v404
    %v1594 = vunpack.c.l.b16 %v405
    %v1595 = vunpack.c.h.b16 %v405
    %v1596 = vunpack.c.l.b16 %v406
    %v1597 = vunpack.c.h.b16 %v406
    %v1598 = vunpack.c.l.b16 %v407
    %v1599 = vunpack.c.h.b16 %v407
    %v1600 = vunpack.c.l.b16 %v408
    %v1601 = vunpack.c.h.b16 %v408
    %v1602 = vunpack.c.l.b16 %v409
    %v1603 = vunpack.c.h.b16 %v409
    %v1604 = vunpack.c.l.b16 %v410
    %v1605 = vunpack.c.h.b16 %v410
    %v1606 = vunpack.c.l.b16 %v411
    %v1607 = vunpack.c.h.b16 %v411
    %v1608 = vunpack.c.l.b16 %v412
    %v1609 = vunpack.c.h.b16 %v412
    %v1610 = vunpack.c.l.b16 %v413
    %v1611 = vunpack.c.h.b16 %v413
    %v1612 = vunpack.c.l.b16 %v414
    %v1613 = vunpack.c.h.b16 %v414
    %v1614 = vunpack.c.l.b16 %v415
    %v1615 = vunpack.c.h.b16 %v415
    %v1616 = vunpack.c.l.b16 %v416
    %v1617 = vunpack.c.h.b16 %v416
    %v1618 = vunpack.c.l.b16 %v417
    %v1619 = vunpack.c.h.b16 %v417
    %v1620 = vunpack.c.l.b16 %v418
    %v1621 = vunpack.c.h.b16 %v418
    %v1622 = vunpack.c.l.b16 %v419
    %v1623 = vunpack.c.h.b16 %v419
    %v1624 = vunpack.c.l.b16 %v420
    %v1625 = vunpack.c.h.b16 %v420
    %v1626 = vunpack.c.l.b16 %v421
    %v1627 = vunpack.c.h.b16 %v421
    %v1628 = vunpack.c.l.b16 %v422
    %v1629 = vunpack.c.h.b16 %v422
    %v1630 = vunpack.c.l.b16 %v423
    %v1631 = vunpack.c.h.b16 %v423
    %v1632 = vunpack.c.l.b16 %v424
    %v1633 = vunpack.c.h.b16 %v424
    %v1634 = vunpack.c.l.b16 %v425
    %v1635 = vunpack.c.h.b16 %v425
    %v1636 = vunpack.c.l.b16 %v426
    %v1637 = vunpack.c.h.b16 %v426
    %v1638 = vunpack.c.l.b16 %v427
    %v1639 = vunpack.c.h.b16 %v427
    %v1640 = vunpack.c.l.b16 %v428
    %v1641 = vunpack.c.h.b16 %v428
    %v1642 = vunpack.c.l.b16 %v429
    %v1643 = vunpack.c.h.b16 %v429
    %v1644 = vunpack.c.l.b16 %v430
    %v1645 = vunpack.c.h.b16 %v430
    %v1646 = vunpack.c.l.b16 %v431
    %v1647 = vunpack.c.h.b16 %v431
    %v1648 = vunpack.c.l.b16 %v432
    %v1649 = vunpack.c.h.b16 %v432
    %v1650 = vunpack.c.l.b16 %v433
    %v1651 = vunpack.c.h.b16 %v433
    %v1652 = vunpack.c.l.b16 %v434
    %v1653 = vunpack.c.h.b16 %v434
    %v1654 = vunpack.c.l.b16 %v435
    %v1655 = vunpack.c.h.b16 %v435
    %v1656 = vunpack.c.l.b16 %v436
    %v1657 = vunpack.c.h.b16 %v436
    %v1658 = vunpack.c.l.b16 %v437
    %v1659 = vunpack.c.h.b16 %v437
    %v1660 = vunpack.c.l.b16 %v438
    %v1661 = vunpack.c.h.b16 %v438
    %v1662 = vunpack.c.l.b16 %v439
    %v1663 = vunpack.c.h.b16 %v439
    %v1664 = vpack.c.b16 %v1090, %v1088
    %v1665 = vpack.c.b16 %v1091, %v1089
    %v1666 = vpack.c.b16 %v1094, %v1092
    %v1667 = vpack.c.b16 %v1095, %v1093
    %v1668 = vpack.c.b16 %v1098, %v1096
    %v1669 = vpack.c.b16 %v1099, %v1097
    %v1670 = vpack.c.b16 %v1102, %v1100
    %v1671 = vpack.c.b16 %v1103, %v1101
    %v1672 = vpack.c.b16 %v1106, %v1104
    %v1673 = vpack.c.b16 %v1107, %v1105
    %v1674 = vpack.c.b16 %v1110, %v1108
    %v1675 = vpack.c.b16 %v1111, %v1109
    %v1676 = vpack.c.b16 %v1114, %v1112
    %v1677 = vpack.c.b16 %v1115, %v1113
    %v1678 = vpack.c.b16 %v1118, %v1116
    %v1679 = vpack.c.b16 %v1119, %v1117
    %v1680 = vpack.c.b16 %v1122, %v1120
    %v1681 = vpack.c.b16 %v1123, %v1121
    %v1682 = vpack.c.b16 %v1126, %v1124
    %v1683 = vpack.c.b16 %v1127, %v1125
    %v1684 = vpack.c.b16 %v1130, %v1128
    %v1685 = vpack.c.b16 %v1131, %v1129
    %v1686 = vpack.c.b16 %v1134, %v1132
    %v1687 = vpack.c.b16 %v1135, %v1133
    %v1688 = vpack.c.b16 %v1138, %v1136
    %v1689 = vpack.c.b16 %v1139, %v1137
    %v1690 = vpack.c.b16 %v1142, %v1140
    %v1691 = vpack.c.b16 %v1143, %v1141
    %v1692 = vpack.c.b16 %v1146, %v1144
    %v1693 = vpack.c.b16 %v1147, %v1145
    %v1694 = vpack.c.b16 %v1150, %v1148
    %v1695 = vpack.c.b16 %v1151, %v1149
    %v1696 = vpack.c.b16 %v1154, %v1152
    %v1697 = vpack.c.b16 %v1155, %v1153
    %v1698 = vpack.c.b16 %v1158, %v1156
    %v1699 = vpack.c.b16 %v1159, %v1157
    %v1700 = vpack.c.b16 %v1162, %v1160
    %v1701 = vpack.c.b16 %v1163, %v1161
    %v1702 = vpack.c.b16 %v1166, %v1164
    %v1703 = vpack.c.b16 %v1167, %v1165
    %v1704 = vpack.c.b16 %v1170, %v1168
    %v1705 = vpack.c.b16 %v1171, %v1169
    %v1706 = vpack.c.b16 %v1174, %v1172
    %v1707 = vpack.c.b16 %v1175, %v1173
    %v1708 = vpack.c.b16 %v1178, %v1176
    %v1709 = vpack.c.b16 %v1179, %v1177
    %v1710 = vpack.c.b16 %v1182, %v1180
    %v1711 = vpack.c.b16 %v1183, %v1181
    %v1712 = vpack.c.b16 %v1186, %v1184
    %v1713 = vpack.c.b16 %v1187, %v1185
    %v1714 = vpack.c.b16 %v1190, %v1188
    %v1715 = vpack.c.b16 %v1191, %v1189
    %v1716 = vpack.c.b16 %v1194, %v1192
    %v1717 = vpack.c.b16 %v1195, %v1193
    %v1718 = vpack.c.b16 %v1198, %v1196
    %v1719 = vpack.c.b16 %v1199, %v1197
    %v1720 = vpack.c.b16 %v1202, %v1200
    %v1721 = vpack.c.b16 %v1203, %v1201
    %v1722 = vpack.c.b16 %v1206, %v1204
    %v1723 = vpack.c.b16 %v1207, %v1205
    %v1724 = vpack.c.b16 %v1210, %v1208
    %v1725 = vpack.c.b16 %v1211, %v1209
    %v1726 = vpack.c.b16 %v1214, %v1212
    %v1727 = vpack.c.b16 %v1215, %v1213
    %v1728 = vpack.c.b16 %v1218, %v1216
    %v1729 = vpack.c.b16 %v1219, %v1217
    %v1730 = vpack.c.b16 %v1222, %v1220
    %v1731 = vpack.c.b16 %v1223, %v1221
    %v1732 = vpack.c.b16 %v1226, %v1224
    %v1733 = vpack.c.b16 %v1227, %v1225
    %v1734 = vpack.c.b16 %v1230, %v1228
    %v1735 = vpack.c.b16 %v1231, %v1229
    %v1736 = vpack.c.b16 %v1234, %v1232
    %v1737 = vpack.c.b16 %v1235, %v1233
    %v1738 = vpack.c.b16 %v1238, %v1236
    %v1739 = vpack.c.b16 %v1239, %v1237
    %v1740 = vpack.c.b16 %v1242, %v1240
    %v1741 = vpack.c.b16 %v1243, %v1241
    %v1742 = vpack.c.b16 %v1246, %v1244
    %v1743 = vpack.c.b16 %v1247, %v1245
    %v1744 = vpack.c.b16 %v1250, %v1248
    %v1745 = vpack.c.b16 %v1251, %v1249
    %v1746 = vpack.c.b16 %v1254, %v1252
    %v1747 = vpack.c.b16 %v1255, %v1253
    %v1748 = vpack.c.b16 %v1258, %v1256
    %v1749 = vpack.c.b16 %v1259, %v1257
    %v1750 = vpack.c.b16 %v1262, %v1260
    %v1751 = vpack.c.b16 %v1263, %v1261
    %v1752 = vpack.c.b16 %v1266, %v1264
    %v1753 = vpack.c.b16 %v1267, %v1265
    %v1754 = vpack.c.b16 %v1270, %v1268
    %v1755 = vpack.c.b16 %v1271, %v1269
    %v1756 = vpack.c.b16 %v1274, %v1272
    %v1757 = vpack.c.b16 %v1275, %v1273
    %v1758 = vpack.c.b16 %v1278, %v1276
    %v1759 = vpack.c.b16 %v1279, %v1277
    %v1760 = vpack.c.b16 %v1282, %v1280
    %v1761 = vpack.c.b16 %v1283, %v1281
    %v1762 = vpack.c.b16 %v1286, %v1284
    %v1763 = vpack.c.b16 %v1287, %v1285
    %v1764 = vpack.c.b16 %v1290, %v1288
    %v1765 = vpack.c.b16 %v1291, %v1289
    %v1766 = vpack.c.b16 %v1294, %v1292
    %v1767 = vpack.c.b16 %v1295, %v1293
    %v1768 = vpack.c.b16 %v1298, %v1296
    %v1769 = vpack.c.b16 %v1299, %v1297
    %v1770 = vpack.c.b16 %v1302, %v1300
    %v1771 = vpack.c.b16 %v1303, %v1301
    %v1772 = vpack.c.b16 %v1306, %v1304
    %v1773 = vpack.c.b16 %v1307, %v1305
    %v1774 = vpack.c.b16 %v1310, %v1308
    %v1775 = vpack.c.b16 %v1311, %v1309
    %v1776 = vpack.c.b16 %v1314, %v1312
    %v1777 = vpack.c.b16 %v1315, %v1313
    %v1778 = vpack.c.b16 %v1318, %v1316
    %v1779 = vpack.c.b16 %v1319, %v1317
    %v1780 = vpack.c.b16 %v1322, %v1320
    %v1781 = vpack.c.b16 %v1323, %v1321
    %v1782 = vpack.c.b16 %v1326, %v1324
    %v1783 = vpack.c.b16 %v1327, %v1325
    %v1784 = vpack.c.b16 %v1330, %v1328
    %v1785 = vpack.c.b16 %v1331, %v1329
    %v1786 = vpack.c.b16 %v1334, %v1332
    %v1787 = vpack.c.b16 %v1335, %v1333
    %v1788 = vpack.c.b16 %v1338, %v1336
    %v1789 = vpack.c.b16 %v1339, %v1337
    %v1790 = vpack.c.b16 %v1342, %v1340
    %v1791 = vpack.c.b16 %v1343, %v1341
    %v1792 = vpack.c.b16 %v1346, %v1344
    %v1793 = vpack.c.b16 %v1347, %v1345
    %v1794 = vpack.c.b16 %v1350, %v1348
    %v1795 = vpack.c.b16 %v1351, %v1349
    %v1796 = vpack.c.b16 %v1354, %v1352
    %v1797 = vpack.c.b16 %v1355, %v1353
    %v1798 = vpack.c.b16 %v1358, %v1356
    %v1799 = vpack.c.b16 %v1359, %v1357
    %v1800 = vpack.c.b16 %v1362, %v1360
    %v1801 = vpack.c.b16 %v1363, %v1361
    %v1802 = vpack.c.b16 %v1366, %v1364
    %v1803 = vpack.c.b16 %v1367, %v1365
    %v1804 = vpack.c.b16 %v1370, %v1368
    %v1805 = vpack.c.b16 %v1371, %v1369
    %v1806 = vpack.c.b16 %v1374, %v1372
    %v1807 = vpack.c.b16 %v1375, %v1373
    %v1808 = vpack.c.b16 %v1378, %v1376
    %v1809 = vpack.c.b16 %v1379, %v1377
    %v1810 = vpack.c.b16 %v1382, %v1380
    %v1811 = vpack.c.b16 %v1383, %v1381
    %v1812 = vpack.c.b16 %v1386, %v1384
    %v1813 = vpack.c.b16 %v1387, %v1385
    %v1814 = vpack.c.b16 %v1390, %v1388
    %v1815 = vpack.c.b16 %v1391, %v1389
    %v1816 = vpack.c.b16 %v1394, %v1392
    %v1817 = vpack.c.b16 %v1395, %v1393
    %v1818 = vpack.c.b16 %v1398, %v1396
    %v1819 = vpack.c.b16 %v1399, %v1397
    %v1820 = vpack.c.b16 %v1402, %v1400
    %v1821 = vpack.c.b16 %v1403, %v1401
    %v1822 = vpack.c.b16 %v1406, %v1404
    %v1823 = vpack.c.b16 %v1407, %v1405
    %v1824 = vpack.c.b16 %v1410, %v1408
    %v1825 = vpack.c.b16 %v1411, %v1409
    %v1826 = vpack.c.b16 %v1414, %v1412
    %v1827 = vpack.c.b16 %v1415, %v1413
    %v1828 = vpack.c.b16 %v1418, %v1416
    %v1829 = vpack.c.b16 %v1419, %v1417
    %v1830 = vpack.c.b16 %v1422, %v1420
    %v1831 = vpack.c.b16 %v1423, %v1421
    %v1832 = vpack.c.b16 %v1426, %v1424
    %v1833 = vpack.c.b16 %v1427, %v1425
    %v1834 = vpack.c.b16 %v1430, %v1428
    %v1835 = vpack.c.b16 %v1431, %v1429
    %v1836 = vpack.c.b16 %v1434, %v1432
    %v1837 = vpack.c.b16 %v1435, %v1433
    %v1838 = vpack.c.b16 %v1438, %v1436
    %v1839 = vpack.c.b16 %v1439, %v1437
    %v1840 = vpack.c.b16 %v1442, %v1440
    %v1841 = vpack.c.b16 %v1443, %v1441
    %v1842 = vpack.c.b16 %v1446, %v1444
    %v1843 = vpack.c.b16 %v1447, %v1445
    %v1844 = vpack.c.b16 %v1450, %v1448
    %v1845 = vpack.c.b16 %v1451, %v1449
    %v1846 = vpack.c.b16 %v1454, %v1452
    %v1847 = vpack.c.b16 %v1455, %v1453
    %v1848 = vpack.c.b16 %v1458, %v1456
    %v1849 = vpack.c.b16 %v1459, %v1457
    %v1850 = vpack.c.b16 %v1462, %v1460
    %v1851 = vpack.c.b16 %v1463, %v1461
    %v1852 = vpack.c.b16 %v1466, %v1464
    %v1853 = vpack.c.b16 %v1467, %v1465
    %v1854 = vpack.c.b16 %v1470, %v1468
    %v1855 = vpack.c.b16 %v1471, %v1469
    %v1856 = vpack.c.b16 %v1474, %v1472
    %v1857 = vpack.c.b16 %v1475, %v1473
    %v1858 = vpack.c.b16 %v1478, %v1476
    %v1859 = vpack.c.b16 %v1479, %v1477
    %v1860 = vpack.c.b16 %v1482, %v1480
    %v1861 = vpack.c.b16 %v1483, %v1481
    %v1862 = vpack.c.b16 %v1486, %v1484
    %v1863 = vpack.c.b16 %v1487, %v1485
    %v1864 = vpack.c.b16 %v1490, %v1488
    %v1865 = vpack.c.b16 %v1491, %v1489
    %v1866 = vpack.c.b16 %v1494, %v1492
    %v1867 = vpack.c.b16 %v1495, %v1493
    %v1868 = vpack.c.b16 %v1498, %v1496
    %v1869 = vpack.c.b16 %v1499, %v1497
    %v1870 = vpack.c.b16 %v1502, %v1500
    %v1871 = vpack.c.b16 %v1503, %v1501
    %v1872 = vpack.c.b16 %v1506, %v1504
    %v1873 = vpack.c.b16 %v1507, %v1505
    %v1874 = vpack.c.b16 %v1510, %v1508
    %v1875 = vpack.c.b16 %v1511, %v1509
    %v1876 = vpack.c.b16 %v1514, %v1512
    %v1877 = vpack.c.b16 %v1515, %v1513
    %v1878 = vpack.c.b16 %v1518, %v1516
    %v1879 = vpack.c.b16 %v1519, %v1517
    %v1880 = vpack.c.b16 %v1522, %v1520
    %v1881 = vpack.c.b16 %v1523, %v1521
    %v1882 = vpack.c.b16 %v1526, %v1524
    %v1883 = vpack.c.b16 %v1527, %v1525
    %v1884 = vpack.c.b16 %v1530, %v1528
    %v1885 = vpack.c.b16 %v1531, %v1529
    %v1886 = vpack.c.b16 %v1534, %v1532
    %v1887 = vpack.c.b16 %v1535, %v1533
    %v1888 = vpack.c.b16 %v1538, %v1536
    %v1889 = vpack.c.b16 %v1539, %v1537
    %v1890 = vpack.c.b16 %v1542, %v1540
    %v1891 = vpack.c.b16 %v1543, %v1541
    %v1892 = vpack.c.b16 %v1546, %v1544
    %v1893 = vpack.c.b16 %v1547, %v1545
    %v1894 = vpack.c.b16 %v1550, %v1548
    %v1895 = vpack.c.b16 %v1551, %v1549
    %v1896 = vpack.c.b16 %v1554, %v1552
    %v1897 = vpack.c.b16 %v1555, %v1553
    %v1898 = vpack.c.b16 %v1558, %v1556
    %v1899 = vpack.c.b16 %v1559, %v1557
    %v1900 = vpack.c.b16 %v1562, %v1560
    %v1901 = vpack.c.b16 %v1563, %v1561
    %v1902 = vpack.c.b16 %v1566, %v1564
    %v1903 = vpack.c.b16 %v1567, %v1565
    %v1904 = vpack.c.b16 %v1570, %v1568
    %v1905 = vpack.c.b16 %v1571, %v1569
    %v1906 = vpack.c.b16 %v1574, %v1572
    %v1907 = vpack.c.b16 %v1575, %v1573
    %v1908 = vpack.c.b16 %v1578, %v1576
    %v1909 = vpack.c.b16 %v1579, %v1577
    %v1910 = vpack.c.b16 %v1582, %v1580
    %v1911 = vpack.c.b16 %v1583, %v1581
    %v1912 = vpack.c.b16 %v1586, %v1584
    %v1913 = vpack.c.b16 %v1587, %v1585
    %v1914 = vpack.c.b16 %v1590, %v1588
    %v1915 = vpack.c.b16 %v1591, %v1589
    %v1916 = vpack.c.b16 %v1594, %v1592
    %v1917 = vpack.c.b16 %v1595, %v1593
    %v1918 = vpack.c.b16 %v1598, %v1596
    %v1919 = vpack.c.b16 %v1599, %v1597
    %v1920 = vpack.c.b16 %v1602, %v1600
    %v1921 = vpack.c.b16 %v1603, %v1601
    %v1922 = vpack.c.b16 %v1606, %v1604
    %v1923 = vpack.c.b16 %v1607, %v1605
    %v1924 = vpack.c.b16 %v1610, %v1608
    %v1925 = vpack.c.b16 %v1611, %v1609
    %v1926 = vpack.c.b16 %v1614, %v1612
    %v1927 = vpack.c.b16 %v1615, %v1613
    %v1928 = vpack.c.b16 %v1618, %v1616
    %v1929 = vpack.c.b16 %v1619, %v1617
    %v1930 = vpack.c.b16 %v1622, %v1620
    %v1931 = vpack.c.b16 %v1623, %v1621
    %v1932 = vpack.c.b16 %v1626, %v1624
    %v1933 = vpack.c.b16 %v1627, %v1625
    %v1934 = vpack.c.b16 %v1630, %v1628
    %v1935 = vpack.c.b16 %v1631, %v1629
    %v1936 = vpack.c.b16 %v1634, %v1632
    %v1937 = vpack.c.b16 %v1635, %v1633
    %v1938 = vpack.c.b16 %v1638, %v1636
    %v1939 = vpack.c.b16 %v1639, %v1637
    %v1940 = vpack.c.b16 %v1642, %v1640
    %v1941 = vpack.c.b16 %v1643, %v1641
    %v1942 = vpack.c.b16 %v1646, %v1644
    %v1943 = vpack.c.b16 %v1647, %v1645
    %v1944 = vpack.c.b16 %v1650, %v1648
    %v1945 = vpack.c.b16 %v1651, %v1649
    %v1946 = vpack.c.b16 %v1654, %v1652
    %v1947 = vpack.c.b16 %v1655, %v1653
    %v1948 = vpack.c.b16 %v1658, %v1656
    %v1949 = vpack.c.b16 %v1659, %v1657
    %v1950 = vpack.c.b16 %v1662, %v1660
    %v1951 = vpack.c.b16 %v1663, %v1661
    %2240 = vmatpush.bf16.msra.mxu0 %v1678
    %2241 = vmatpush.bf16.msra.mxu0 %v1676
    %2242 = vmatpush.bf16.msra.mxu0 %v1674
    %2243 = vmatpush.bf16.msra.mxu0 %v1672
    %2244 = vmatpush.bf16.msra.mxu0 %v1670
    %2245 = vmatpush.bf16.msra.mxu0 %v1668
    %2246 = vmatpush.bf16.msra.mxu0 %v1666
    %2247 = vmatpush.bf16.msra.mxu0 %v1664
    %2248 = vmatmul.bf16.gmra.mxu0 %v656
    %v2249 = vpop.f32.mrf.mxu0
    %v2250 = vadd.f32 0.0, %v2249
    %v2251 = vpop.f32.mrf.mxu0
    %v2252 = vadd.f32 0.0, %v2251
    %2253 = vmatmul.bf16.gmra.mxu0 %v674
    %v2254 = vpop.f32.mrf.mxu0
    %v2255 = vadd.f32 0.0, %v2254
    %v2256 = vpop.f32.mrf.mxu0
    %v2257 = vadd.f32 0.0, %v2256
    %2258 = vmatmul.bf16.gmra.mxu0 %v692
    %v2259 = vpop.f32.mrf.mxu0
    %v2260 = vadd.f32 0.0, %v2259
    %v2261 = vpop.f32.mrf.mxu0
    %v2262 = vadd.f32 0.0, %v2261
    %2263 = vmatmul.bf16.gmra.mxu0 %v710
    %v2264 = vpop.f32.mrf.mxu0
    %v2265 = vadd.f32 0.0, %v2264
    %v2266 = vpop.f32.mrf.mxu0
    %v2267 = vadd.f32 0.0, %v2266
    %2268 = vdwg.mxu0
    %2269 = vmatpush.bf16.msra.mxu0 %v1694
    %2270 = vmatpush.bf16.msra.mxu0 %v1692
    %2271 = vmatpush.bf16.msra.mxu0 %v1690
    %2272 = vmatpush.bf16.msra.mxu0 %v1688
    %2273 = vmatpush.bf16.msra.mxu0 %v1686
    %2274 = vmatpush.bf16.msra.mxu0 %v1684
    %2275 = vmatpush.bf16.msra.mxu0 %v1682
    %2276 = vmatpush.bf16.msra.mxu0 %v1680
    %2277 = vmatmul.bf16.gmra.mxu0 %v657
    %v2278 = vpop.f32.mrf.mxu0
    %v2279 = vadd.f32 %v2250, %v2278
    %v2280 = vpop.f32.mrf.mxu0
    %v2281 = vadd.f32 %v2252, %v2280
    %2282 = vmatmul.bf16.gmra.mxu0 %v675
    %v2283 = vpop.f32.mrf.mxu0
    %v2284 = vadd.f32 %v2255, %v2283
    %v2285 = vpop.f32.mrf.mxu0
    %v2286 = vadd.f32 %v2257, %v2285
    %2287 = vmatmul.bf16.gmra.mxu0 %v693
    %v2288 = vpop.f32.mrf.mxu0
    %v2289 = vadd.f32 %v2260, %v2288
    %v2290 = vpop.f32.mrf.mxu0
    %v2291 = vadd.f32 %v2262, %v2290
    %2292 = vmatmul.bf16.gmra.mxu0 %v711
    %v2293 = vpop.f32.mrf.mxu0
    %v2294 = vadd.f32 %v2265, %v2293
    %v2295 = vpop.f32.mrf.mxu0
    %v2296 = vadd.f32 %v2267, %v2295
    %2297 = vdwg.mxu0
    %2298 = vmatpush.bf16.msra.mxu0 %v1710
    %2299 = vmatpush.bf16.msra.mxu0 %v1708
    %2300 = vmatpush.bf16.msra.mxu0 %v1706
    %2301 = vmatpush.bf16.msra.mxu0 %v1704
    %2302 = vmatpush.bf16.msra.mxu0 %v1702
    %2303 = vmatpush.bf16.msra.mxu0 %v1700
    %2304 = vmatpush.bf16.msra.mxu0 %v1698
    %2305 = vmatpush.bf16.msra.mxu0 %v1696
    %2306 = vmatmul.bf16.gmra.mxu0 %v658
    %v2307 = vpop.f32.mrf.mxu0
    %v2308 = vadd.f32 %v2279, %v2307
    %v2309 = vpop.f32.mrf.mxu0
    %v2310 = vadd.f32 %v2281, %v2309
    %2311 = vmatmul.bf16.gmra.mxu0 %v676
    %v2312 = vpop.f32.mrf.mxu0
    %v2313 = vadd.f32 %v2284, %v2312
    %v2314 = vpop.f32.mrf.mxu0
    %v2315 = vadd.f32 %v2286, %v2314
    %2316 = vmatmul.bf16.gmra.mxu0 %v694
    %v2317 = vpop.f32.mrf.mxu0
    %v2318 = vadd.f32 %v2289, %v2317
    %v2319 = vpop.f32.mrf.mxu0
    %v2320 = vadd.f32 %v2291, %v2319
    %2321 = vmatmul.bf16.gmra.mxu0 %v712
    %v2322 = vpop.f32.mrf.mxu0
    %v2323 = vadd.f32 %v2294, %v2322
    %v2324 = vpop.f32.mrf.mxu0
    %v2325 = vadd.f32 %v2296, %v2324
    %2326 = vdwg.mxu0
    %2327 = vmatpush.bf16.msra.mxu0 %v1726
    %2328 = vmatpush.bf16.msra.mxu0 %v1724
    %2329 = vmatpush.bf16.msra.mxu0 %v1722
    %2330 = vmatpush.bf16.msra.mxu0 %v1720
    %2331 = vmatpush.bf16.msra.mxu0 %v1718
    %2332 = vmatpush.bf16.msra.mxu0 %v1716
    %2333 = vmatpush.bf16.msra.mxu0 %v1714
    %2334 = vmatpush.bf16.msra.mxu0 %v1712
    %2335 = vmatmul.bf16.gmra.mxu0 %v659
    %v2336 = vpop.f32.mrf.mxu0
    %v2337 = vadd.f32 %v2308, %v2336
    %v2338 = vpop.f32.mrf.mxu0
    %v2339 = vadd.f32 %v2310, %v2338
    %2340 = vmatmul.bf16.gmra.mxu0 %v677
    %v2341 = vpop.f32.mrf.mxu0
    %v2342 = vadd.f32 %v2313, %v2341
    %v2343 = vpop.f32.mrf.mxu0
    %v2344 = vadd.f32 %v2315, %v2343
    %2345 = vmatmul.bf16.gmra.mxu0 %v695
    %v2346 = vpop.f32.mrf.mxu0
    %v2347 = vadd.f32 %v2318, %v2346
    %v2348 = vpop.f32.mrf.mxu0
    %v2349 = vadd.f32 %v2320, %v2348
    %2350 = vmatmul.bf16.gmra.mxu0 %v713
    %v2351 = vpop.f32.mrf.mxu0
    %v2352 = vadd.f32 %v2323, %v2351
    %v2353 = vpop.f32.mrf.mxu0
    %v2354 = vadd.f32 %v2325, %v2353
    %2355 = vdwg.mxu0
    %2356 = vmatpush.bf16.msra.mxu0 %v1742
    %2357 = vmatpush.bf16.msra.mxu0 %v1740
    %2358 = vmatpush.bf16.msra.mxu0 %v1738
    %2359 = vmatpush.bf16.msra.mxu0 %v1736
    %2360 = vmatpush.bf16.msra.mxu0 %v1734
    %2361 = vmatpush.bf16.msra.mxu0 %v1732
    %2362 = vmatpush.bf16.msra.mxu0 %v1730
    %2363 = vmatpush.bf16.msra.mxu0 %v1728
    %2364 = vmatmul.bf16.gmra.mxu0 %v660
    %v2365 = vpop.f32.mrf.mxu0
    %v2366 = vadd.f32 %v2337, %v2365
    %v2367 = vpop.f32.mrf.mxu0
    %v2368 = vadd.f32 %v2339, %v2367
    %2369 = vmatmul.bf16.gmra.mxu0 %v678
    %v2370 = vpop.f32.mrf.mxu0
    %v2371 = vadd.f32 %v2342, %v2370
    %v2372 = vpop.f32.mrf.mxu0
    %v2373 = vadd.f32 %v2344, %v2372
    %2374 = vmatmul.bf16.gmra.mxu0 %v696
    %v2375 = vpop.f32.mrf.mxu0
    %v2376 = vadd.f32 %v2347, %v2375
    %v2377 = vpop.f32.mrf.mxu0
    %v2378 = vadd.f32 %v2349, %v2377
    %2379 = vmatmul.bf16.gmra.mxu0 %v714
    %v2380 = vpop.f32.mrf.mxu0
    %v2381 = vadd.f32 %v2352, %v2380
    %v2382 = vpop.f32.mrf.mxu0
    %v2383 = vadd.f32 %v2354, %v2382
    %2384 = vdwg.mxu0
    %2385 = vmatpush.bf16.msra.mxu0 %v1758
    %2386 = vmatpush.bf16.msra.mxu0 %v1756
    %2387 = vmatpush.bf16.msra.mxu0 %v1754
    %2388 = vmatpush.bf16.msra.mxu0 %v1752
    %2389 = vmatpush.bf16.msra.mxu0 %v1750
    %2390 = vmatpush.bf16.msra.mxu0 %v1748
    %2391 = vmatpush.bf16.msra.mxu0 %v1746
    %2392 = vmatpush.bf16.msra.mxu0 %v1744
    %2393 = vmatmul.bf16.gmra.mxu0 %v661
    %v2394 = vpop.f32.mrf.mxu0
    %v2395 = vadd.f32 %v2366, %v2394
    %v2396 = vpop.f32.mrf.mxu0
    %v2397 = vadd.f32 %v2368, %v2396
    %2398 = vmatmul.bf16.gmra.mxu0 %v679
    %v2399 = vpop.f32.mrf.mxu0
    %v2400 = vadd.f32 %v2371, %v2399
    %v2401 = vpop.f32.mrf.mxu0
    %v2402 = vadd.f32 %v2373, %v2401
    %2403 = vmatmul.bf16.gmra.mxu0 %v697
    %v2404 = vpop.f32.mrf.mxu0
    %v2405 = vadd.f32 %v2376, %v2404
    %v2406 = vpop.f32.mrf.mxu0
    %v2407 = vadd.f32 %v2378, %v2406
    %2408 = vmatmul.bf16.gmra.mxu0 %v715
    %v2409 = vpop.f32.mrf.mxu0
    %v2410 = vadd.f32 %v2381, %v2409
    %v2411 = vpop.f32.mrf.mxu0
    %v2412 = vadd.f32 %v2383, %v2411
    %2413 = vdwg.mxu0
    %2414 = vmatpush.bf16.msra.mxu0 %v1774
    %2415 = vmatpush.bf16.msra.mxu0 %v1772
    %2416 = vmatpush.bf16.msra.mxu0 %v1770
    %2417 = vmatpush.bf16.msra.mxu0 %v1768
    %2418 = vmatpush.bf16.msra.mxu0 %v1766
    %2419 = vmatpush.bf16.msra.mxu0 %v1764
    %2420 = vmatpush.bf16.msra.mxu0 %v1762
    %2421 = vmatpush.bf16.msra.mxu0 %v1760
    %2422 = vmatmul.bf16.gmra.mxu0 %v662
    %v2423 = vpop.f32.mrf.mxu0
    %v2424 = vadd.f32 %v2395, %v2423
    %v2425 = vpop.f32.mrf.mxu0
    %v2426 = vadd.f32 %v2397, %v2425
    %2427 = vmatmul.bf16.gmra.mxu0 %v680
    %v2428 = vpop.f32.mrf.mxu0
    %v2429 = vadd.f32 %v2400, %v2428
    %v2430 = vpop.f32.mrf.mxu0
    %v2431 = vadd.f32 %v2402, %v2430
    %2432 = vmatmul.bf16.gmra.mxu0 %v698
    %v2433 = vpop.f32.mrf.mxu0
    %v2434 = vadd.f32 %v2405, %v2433
    %v2435 = vpop.f32.mrf.mxu0
    %v2436 = vadd.f32 %v2407, %v2435
    %2437 = vmatmul.bf16.gmra.mxu0 %v716
    %v2438 = vpop.f32.mrf.mxu0
    %v2439 = vadd.f32 %v2410, %v2438
    %v2440 = vpop.f32.mrf.mxu0
    %v2441 = vadd.f32 %v2412, %v2440
    %2442 = vdwg.mxu0
    %2443 = vmatpush.bf16.msra.mxu0 %v1790
    %2444 = vmatpush.bf16.msra.mxu0 %v1788
    %2445 = vmatpush.bf16.msra.mxu0 %v1786
    %2446 = vmatpush.bf16.msra.mxu0 %v1784
    %2447 = vmatpush.bf16.msra.mxu0 %v1782
    %2448 = vmatpush.bf16.msra.mxu0 %v1780
    %2449 = vmatpush.bf16.msra.mxu0 %v1778
    %2450 = vmatpush.bf16.msra.mxu0 %v1776
    %2451 = vmatmul.bf16.gmra.mxu0 %v663
    %v2452 = vpop.f32.mrf.mxu0
    %v2453 = vadd.f32 %v2424, %v2452
    %v2454 = vpop.f32.mrf.mxu0
    %v2455 = vadd.f32 %v2426, %v2454
    %2456 = vmatmul.bf16.gmra.mxu0 %v681
    %v2457 = vpop.f32.mrf.mxu0
    %v2458 = vadd.f32 %v2429, %v2457
    %v2459 = vpop.f32.mrf.mxu0
    %v2460 = vadd.f32 %v2431, %v2459
    %2461 = vmatmul.bf16.gmra.mxu0 %v699
    %v2462 = vpop.f32.mrf.mxu0
    %v2463 = vadd.f32 %v2434, %v2462
    %v2464 = vpop.f32.mrf.mxu0
    %v2465 = vadd.f32 %v2436, %v2464
    %2466 = vmatmul.bf16.gmra.mxu0 %v717
    %v2467 = vpop.f32.mrf.mxu0
    %v2468 = vadd.f32 %v2439, %v2467
    %v2469 = vpop.f32.mrf.mxu0
    %v2470 = vadd.f32 %v2441, %v2469
    %2471 = vdwg.mxu0
    %2472 = vmatpush.bf16.msra.mxu0 %v1806
    %2473 = vmatpush.bf16.msra.mxu0 %v1804
    %2474 = vmatpush.bf16.msra.mxu0 %v1802
    %2475 = vmatpush.bf16.msra.mxu0 %v1800
    %2476 = vmatpush.bf16.msra.mxu0 %v1798
    %2477 = vmatpush.bf16.msra.mxu0 %v1796
    %2478 = vmatpush.bf16.msra.mxu0 %v1794
    %2479 = vmatpush.bf16.msra.mxu0 %v1792
    %2480 = vmatmul.bf16.gmra.mxu0 %v664
    %v2481 = vpop.f32.mrf.mxu0
    %v2482 = vadd.f32 %v2453, %v2481
    %v2483 = vpop.f32.mrf.mxu0
    %v2484 = vadd.f32 %v2455, %v2483
    %2485 = vmatmul.bf16.gmra.mxu0 %v682
    %v2486 = vpop.f32.mrf.mxu0
    %v2487 = vadd.f32 %v2458, %v2486
    %v2488 = vpop.f32.mrf.mxu0
    %v2489 = vadd.f32 %v2460, %v2488
    %2490 = vmatmul.bf16.gmra.mxu0 %v700
    %v2491 = vpop.f32.mrf.mxu0
    %v2492 = vadd.f32 %v2463, %v2491
    %v2493 = vpop.f32.mrf.mxu0
    %v2494 = vadd.f32 %v2465, %v2493
    %2495 = vmatmul.bf16.gmra.mxu0 %v718
    %v2496 = vpop.f32.mrf.mxu0
    %v2497 = vadd.f32 %v2468, %v2496
    %v2498 = vpop.f32.mrf.mxu0
    %v2499 = vadd.f32 %v2470, %v2498
    %2500 = vdwg.mxu0
    %2501 = vmatpush.bf16.msra.mxu0 %v1822
    %2502 = vmatpush.bf16.msra.mxu0 %v1820
    %2503 = vmatpush.bf16.msra.mxu0 %v1818
    %2504 = vmatpush.bf16.msra.mxu0 %v1816
    %2505 = vmatpush.bf16.msra.mxu0 %v1814
    %2506 = vmatpush.bf16.msra.mxu0 %v1812
    %2507 = vmatpush.bf16.msra.mxu0 %v1810
    %2508 = vmatpush.bf16.msra.mxu0 %v1808
    %2509 = vmatmul.bf16.gmra.mxu0 %v665
    %v2510 = vpop.f32.mrf.mxu0
    %v2511 = vadd.f32 %v2482, %v2510
    %v2512 = vpop.f32.mrf.mxu0
    %v2513 = vadd.f32 %v2484, %v2512
    %2514 = vmatmul.bf16.gmra.mxu0 %v683
    %v2515 = vpop.f32.mrf.mxu0
    %v2516 = vadd.f32 %v2487, %v2515
    %v2517 = vpop.f32.mrf.mxu0
    %v2518 = vadd.f32 %v2489, %v2517
    %2519 = vmatmul.bf16.gmra.mxu0 %v701
    %v2520 = vpop.f32.mrf.mxu0
    %v2521 = vadd.f32 %v2492, %v2520
    %v2522 = vpop.f32.mrf.mxu0
    %v2523 = vadd.f32 %v2494, %v2522
    %2524 = vmatmul.bf16.gmra.mxu0 %v719
    %v2525 = vpop.f32.mrf.mxu0
    %v2526 = vadd.f32 %v2497, %v2525
    %v2527 = vpop.f32.mrf.mxu0
    %v2528 = vadd.f32 %v2499, %v2527
    %2529 = vdwg.mxu0
    %2530 = vmatpush.bf16.msra.mxu0 %v1838
    %2531 = vmatpush.bf16.msra.mxu0 %v1836
    %2532 = vmatpush.bf16.msra.mxu0 %v1834
    %2533 = vmatpush.bf16.msra.mxu0 %v1832
    %2534 = vmatpush.bf16.msra.mxu0 %v1830
    %2535 = vmatpush.bf16.msra.mxu0 %v1828
    %2536 = vmatpush.bf16.msra.mxu0 %v1826
    %2537 = vmatpush.bf16.msra.mxu0 %v1824
    %2538 = vmatmul.bf16.gmra.mxu0 %v666
    %v2539 = vpop.f32.mrf.mxu0
    %v2540 = vadd.f32 %v2511, %v2539
    %v2541 = vpop.f32.mrf.mxu0
    %v2542 = vadd.f32 %v2513, %v2541
    %2543 = vmatmul.bf16.gmra.mxu0 %v684
    %v2544 = vpop.f32.mrf.mxu0
    %v2545 = vadd.f32 %v2516, %v2544
    %v2546 = vpop.f32.mrf.mxu0
    %v2547 = vadd.f32 %v2518, %v2546
    %2548 = vmatmul.bf16.gmra.mxu0 %v702
    %v2549 = vpop.f32.mrf.mxu0
    %v2550 = vadd.f32 %v2521, %v2549
    %v2551 = vpop.f32.mrf.mxu0
    %v2552 = vadd.f32 %v2523, %v2551
    %2553 = vmatmul.bf16.gmra.mxu0 %v720
    %v2554 = vpop.f32.mrf.mxu0
    %v2555 = vadd.f32 %v2526, %v2554
    %v2556 = vpop.f32.mrf.mxu0
    %v2557 = vadd.f32 %v2528, %v2556
    %2558 = vdwg.mxu0
    %2559 = vmatpush.bf16.msra.mxu0 %v1854
    %2560 = vmatpush.bf16.msra.mxu0 %v1852
    %2561 = vmatpush.bf16.msra.mxu0 %v1850
    %2562 = vmatpush.bf16.msra.mxu0 %v1848
    %2563 = vmatpush.bf16.msra.mxu0 %v1846
    %2564 = vmatpush.bf16.msra.mxu0 %v1844
    %2565 = vmatpush.bf16.msra.mxu0 %v1842
    %2566 = vmatpush.bf16.msra.mxu0 %v1840
    %2567 = vmatmul.bf16.gmra.mxu0 %v667
    %v2568 = vpop.f32.mrf.mxu0
    %v2569 = vadd.f32 %v2540, %v2568
    %v2570 = vpop.f32.mrf.mxu0
    %v2571 = vadd.f32 %v2542, %v2570
    %2572 = vmatmul.bf16.gmra.mxu0 %v685
    %v2573 = vpop.f32.mrf.mxu0
    %v2574 = vadd.f32 %v2545, %v2573
    %v2575 = vpop.f32.mrf.mxu0
    %v2576 = vadd.f32 %v2547, %v2575
    %2577 = vmatmul.bf16.gmra.mxu0 %v703
    %v2578 = vpop.f32.mrf.mxu0
    %v2579 = vadd.f32 %v2550, %v2578
    %v2580 = vpop.f32.mrf.mxu0
    %v2581 = vadd.f32 %v2552, %v2580
    %2582 = vmatmul.bf16.gmra.mxu0 %v721
    %v2583 = vpop.f32.mrf.mxu0
    %v2584 = vadd.f32 %v2555, %v2583
    %v2585 = vpop.f32.mrf.mxu0
    %v2586 = vadd.f32 %v2557, %v2585
    %2587 = vdwg.mxu0
    %2588 = vmatpush.bf16.msra.mxu0 %v1870
    %2589 = vmatpush.bf16.msra.mxu0 %v1868
    %2590 = vmatpush.bf16.msra.mxu0 %v1866
    %2591 = vmatpush.bf16.msra.mxu0 %v1864
    %2592 = vmatpush.bf16.msra.mxu0 %v1862
    %2593 = vmatpush.bf16.msra.mxu0 %v1860
    %2594 = vmatpush.bf16.msra.mxu0 %v1858
    %2595 = vmatpush.bf16.msra.mxu0 %v1856
    %2596 = vmatmul.bf16.gmra.mxu0 %v668
    %v2597 = vpop.f32.mrf.mxu0
    %v2598 = vadd.f32 %v2569, %v2597
    %v2599 = vpop.f32.mrf.mxu0
    %v2600 = vadd.f32 %v2571, %v2599
    %2601 = vmatmul.bf16.gmra.mxu0 %v686
    %v2602 = vpop.f32.mrf.mxu0
    %v2603 = vadd.f32 %v2574, %v2602
    %v2604 = vpop.f32.mrf.mxu0
    %v2605 = vadd.f32 %v2576, %v2604
    %2606 = vmatmul.bf16.gmra.mxu0 %v704
    %v2607 = vpop.f32.mrf.mxu0
    %v2608 = vadd.f32 %v2579, %v2607
    %v2609 = vpop.f32.mrf.mxu0
    %v2610 = vadd.f32 %v2581, %v2609
    %2611 = vmatmul.bf16.gmra.mxu0 %v722
    %v2612 = vpop.f32.mrf.mxu0
    %v2613 = vadd.f32 %v2584, %v2612
    %v2614 = vpop.f32.mrf.mxu0
    %v2615 = vadd.f32 %v2586, %v2614
    %2616 = vdwg.mxu0
    %2617 = vmatpush.bf16.msra.mxu0 %v1886
    %2618 = vmatpush.bf16.msra.mxu0 %v1884
    %2619 = vmatpush.bf16.msra.mxu0 %v1882
    %2620 = vmatpush.bf16.msra.mxu0 %v1880
    %2621 = vmatpush.bf16.msra.mxu0 %v1878
    %2622 = vmatpush.bf16.msra.mxu0 %v1876
    %2623 = vmatpush.bf16.msra.mxu0 %v1874
    %2624 = vmatpush.bf16.msra.mxu0 %v1872
    %2625 = vmatmul.bf16.gmra.mxu0 %v669
    %v2626 = vpop.f32.mrf.mxu0
    %v2627 = vadd.f32 %v2598, %v2626
    %v2628 = vpop.f32.mrf.mxu0
    %v2629 = vadd.f32 %v2600, %v2628
    %2630 = vmatmul.bf16.gmra.mxu0 %v687
    %v2631 = vpop.f32.mrf.mxu0
    %v2632 = vadd.f32 %v2603, %v2631
    %v2633 = vpop.f32.mrf.mxu0
    %v2634 = vadd.f32 %v2605, %v2633
    %2635 = vmatmul.bf16.gmra.mxu0 %v705
    %v2636 = vpop.f32.mrf.mxu0
    %v2637 = vadd.f32 %v2608, %v2636
    %v2638 = vpop.f32.mrf.mxu0
    %v2639 = vadd.f32 %v2610, %v2638
    %2640 = vmatmul.bf16.gmra.mxu0 %v723
    %v2641 = vpop.f32.mrf.mxu0
    %v2642 = vadd.f32 %v2613, %v2641
    %v2643 = vpop.f32.mrf.mxu0
    %v2644 = vadd.f32 %v2615, %v2643
    %2645 = vdwg.mxu0
    %2646 = vmatpush.bf16.msra.mxu0 %v1902
    %2647 = vmatpush.bf16.msra.mxu0 %v1900
    %2648 = vmatpush.bf16.msra.mxu0 %v1898
    %2649 = vmatpush.bf16.msra.mxu0 %v1896
    %2650 = vmatpush.bf16.msra.mxu0 %v1894
    %2651 = vmatpush.bf16.msra.mxu0 %v1892
    %2652 = vmatpush.bf16.msra.mxu0 %v1890
    %2653 = vmatpush.bf16.msra.mxu0 %v1888
    %2654 = vmatmul.bf16.gmra.mxu0 %v670
    %v2655 = vpop.f32.mrf.mxu0
    %v2656 = vadd.f32 %v2627, %v2655
    %v2657 = vpop.f32.mrf.mxu0
    %v2658 = vadd.f32 %v2629, %v2657
    %2659 = vmatmul.bf16.gmra.mxu0 %v688
    %v2660 = vpop.f32.mrf.mxu0
    %v2661 = vadd.f32 %v2632, %v2660
    %v2662 = vpop.f32.mrf.mxu0
    %v2663 = vadd.f32 %v2634, %v2662
    %2664 = vmatmul.bf16.gmra.mxu0 %v706
    %v2665 = vpop.f32.mrf.mxu0
    %v2666 = vadd.f32 %v2637, %v2665
    %v2667 = vpop.f32.mrf.mxu0
    %v2668 = vadd.f32 %v2639, %v2667
    %2669 = vmatmul.bf16.gmra.mxu0 %v724
    %v2670 = vpop.f32.mrf.mxu0
    %v2671 = vadd.f32 %v2642, %v2670
    %v2672 = vpop.f32.mrf.mxu0
    %v2673 = vadd.f32 %v2644, %v2672
    %2674 = vdwg.mxu0
    %2675 = vmatpush.bf16.msra.mxu0 %v1918
    %2676 = vmatpush.bf16.msra.mxu0 %v1916
    %2677 = vmatpush.bf16.msra.mxu0 %v1914
    %2678 = vmatpush.bf16.msra.mxu0 %v1912
    %2679 = vmatpush.bf16.msra.mxu0 %v1910
    %2680 = vmatpush.bf16.msra.mxu0 %v1908
    %2681 = vmatpush.bf16.msra.mxu0 %v1906
    %2682 = vmatpush.bf16.msra.mxu0 %v1904
    %2683 = vmatmul.bf16.gmra.mxu0 %v671
    %v2684 = vpop.f32.mrf.mxu0
    %v2685 = vadd.f32 %v2656, %v2684
    %v2686 = vpop.f32.mrf.mxu0
    %v2687 = vadd.f32 %v2658, %v2686
    %2688 = vmatmul.bf16.gmra.mxu0 %v689
    %v2689 = vpop.f32.mrf.mxu0
    %v2690 = vadd.f32 %v2661, %v2689
    %v2691 = vpop.f32.mrf.mxu0
    %v2692 = vadd.f32 %v2663, %v2691
    %2693 = vmatmul.bf16.gmra.mxu0 %v707
    %v2694 = vpop.f32.mrf.mxu0
    %v2695 = vadd.f32 %v2666, %v2694
    %v2696 = vpop.f32.mrf.mxu0
    %v2697 = vadd.f32 %v2668, %v2696
    %2698 = vmatmul.bf16.gmra.mxu0 %v725
    %v2699 = vpop.f32.mrf.mxu0
    %v2700 = vadd.f32 %v2671, %v2699
    %v2701 = vpop.f32.mrf.mxu0
    %v2702 = vadd.f32 %v2673, %v2701
    %2703 = vdwg.mxu0
    %2704 = vmatpush.bf16.msra.mxu0 %v1934
    %2705 = vmatpush.bf16.msra.mxu0 %v1932
    %2706 = vmatpush.bf16.msra.mxu0 %v1930
    %2707 = vmatpush.bf16.msra.mxu0 %v1928
    %2708 = vmatpush.bf16.msra.mxu0 %v1926
    %2709 = vmatpush.bf16.msra.mxu0 %v1924
    %2710 = vmatpush.bf16.msra.mxu0 %v1922
    %2711 = vmatpush.bf16.msra.mxu0 %v1920
    %2712 = vmatmul.bf16.gmra.mxu0 %v672
    %v2713 = vpop.f32.mrf.mxu0
    %v2714 = vadd.f32 %v2685, %v2713
    %v2715 = vpop.f32.mrf.mxu0
    %v2716 = vadd.f32 %v2687, %v2715
    %2717 = vmatmul.bf16.gmra.mxu0 %v690
    %v2718 = vpop.f32.mrf.mxu0
    %v2719 = vadd.f32 %v2690, %v2718
    %v2720 = vpop.f32.mrf.mxu0
    %v2721 = vadd.f32 %v2692, %v2720
    %2722 = vmatmul.bf16.gmra.mxu0 %v708
    %v2723 = vpop.f32.mrf.mxu0
    %v2724 = vadd.f32 %v2695, %v2723
    %v2725 = vpop.f32.mrf.mxu0
    %v2726 = vadd.f32 %v2697, %v2725
    %2727 = vmatmul.bf16.gmra.mxu0 %v726
    %v2728 = vpop.f32.mrf.mxu0
    %v2729 = vadd.f32 %v2700, %v2728
    %v2730 = vpop.f32.mrf.mxu0
    %v2731 = vadd.f32 %v2702, %v2730
    %2732 = vdwg.mxu0
    %2733 = vmatpush.bf16.msra.mxu0 %v1950
    %2734 = vmatpush.bf16.msra.mxu0 %v1948
    %2735 = vmatpush.bf16.msra.mxu0 %v1946
    %2736 = vmatpush.bf16.msra.mxu0 %v1944
    %2737 = vmatpush.bf16.msra.mxu0 %v1942
    %2738 = vmatpush.bf16.msra.mxu0 %v1940
    %2739 = vmatpush.bf16.msra.mxu0 %v1938
    %2740 = vmatpush.bf16.msra.mxu0 %v1936
    %2741 = vmatmul.bf16.gmra.mxu0 %v673
    %v2742 = vpop.f32.mrf.mxu0
    %v2743 = vadd.f32 %v2714, %v2742
    %v2744 = vpop.f32.mrf.mxu0
    %v2745 = vadd.f32 %v2716, %v2744
    %2746 = vmatmul.bf16.gmra.mxu0 %v691
    %v2747 = vpop.f32.mrf.mxu0
    %v2748 = vadd.f32 %v2719, %v2747
    %v2749 = vpop.f32.mrf.mxu0
    %v2750 = vadd.f32 %v2721, %v2749
    %2751 = vmatmul.bf16.gmra.mxu0 %v709
    %v2752 = vpop.f32.mrf.mxu0
    %v2753 = vadd.f32 %v2724, %v2752
    %v2754 = vpop.f32.mrf.mxu0
    %v2755 = vadd.f32 %v2726, %v2754
    %2756 = vmatmul.bf16.gmra.mxu0 %v727
    %v2757 = vpop.f32.mrf.mxu0
    %v2758 = vadd.f32 %v2729, %v2757
    %v2759 = vpop.f32.mrf.mxu0
    %v2760 = vadd.f32 %v2731, %v2759
    %2761 = vdwg.mxu0
    %2762 = vmatpush.bf16.msra.mxu0 %v1679
    %2763 = vmatpush.bf16.msra.mxu0 %v1677
    %2764 = vmatpush.bf16.msra.mxu0 %v1675
    %2765 = vmatpush.bf16.msra.mxu0 %v1673
    %2766 = vmatpush.bf16.msra.mxu0 %v1671
    %2767 = vmatpush.bf16.msra.mxu0 %v1669
    %2768 = vmatpush.bf16.msra.mxu0 %v1667
    %2769 = vmatpush.bf16.msra.mxu0 %v1665
    %2770 = vmatmul.bf16.gmra.mxu0 %v656
    %v2771 = vpop.f32.mrf.mxu0
    %v2772 = vadd.f32 0.0, %v2771
    %v2773 = vpop.f32.mrf.mxu0
    %v2774 = vadd.f32 0.0, %v2773
    %2775 = vmatmul.bf16.gmra.mxu0 %v674
    %v2776 = vpop.f32.mrf.mxu0
    %v2777 = vadd.f32 0.0, %v2776
    %v2778 = vpop.f32.mrf.mxu0
    %v2779 = vadd.f32 0.0, %v2778
    %2780 = vmatmul.bf16.gmra.mxu0 %v692
    %v2781 = vpop.f32.mrf.mxu0
    %v2782 = vadd.f32 0.0, %v2781
    %v2783 = vpop.f32.mrf.mxu0
    %v2784 = vadd.f32 0.0, %v2783
    %2785 = vmatmul.bf16.gmra.mxu0 %v710
    %v2786 = vpop.f32.mrf.mxu0
    %v2787 = vadd.f32 0.0, %v2786
    %v2788 = vpop.f32.mrf.mxu0
    %v2789 = vadd.f32 0.0, %v2788
    %2790 = vdwg.mxu0
    %2791 = vmatpush.bf16.msra.mxu0 %v1695
    %2792 = vmatpush.bf16.msra.mxu0 %v1693
    %2793 = vmatpush.bf16.msra.mxu0 %v1691
    %2794 = vmatpush.bf16.msra.mxu0 %v1689
    %2795 = vmatpush.bf16.msra.mxu0 %v1687
    %2796 = vmatpush.bf16.msra.mxu0 %v1685
    %2797 = vmatpush.bf16.msra.mxu0 %v1683
    %2798 = vmatpush.bf16.msra.mxu0 %v1681
    %2799 = vmatmul.bf16.gmra.mxu0 %v657
    %v2800 = vpop.f32.mrf.mxu0
    %v2801 = vadd.f32 %v2772, %v2800
    %v2802 = vpop.f32.mrf.mxu0
    %v2803 = vadd.f32 %v2774, %v2802
    %2804 = vmatmul.bf16.gmra.mxu0 %v675
    %v2805 = vpop.f32.mrf.mxu0
    %v2806 = vadd.f32 %v2777, %v2805
    %v2807 = vpop.f32.mrf.mxu0
    %v2808 = vadd.f32 %v2779, %v2807
    %2809 = vmatmul.bf16.gmra.mxu0 %v693
    %v2810 = vpop.f32.mrf.mxu0
    %v2811 = vadd.f32 %v2782, %v2810
    %v2812 = vpop.f32.mrf.mxu0
    %v2813 = vadd.f32 %v2784, %v2812
    %2814 = vmatmul.bf16.gmra.mxu0 %v711
    %v2815 = vpop.f32.mrf.mxu0
    %v2816 = vadd.f32 %v2787, %v2815
    %v2817 = vpop.f32.mrf.mxu0
    %v2818 = vadd.f32 %v2789, %v2817
    %2819 = vdwg.mxu0
    %2820 = vmatpush.bf16.msra.mxu0 %v1711
    %2821 = vmatpush.bf16.msra.mxu0 %v1709
    %2822 = vmatpush.bf16.msra.mxu0 %v1707
    %2823 = vmatpush.bf16.msra.mxu0 %v1705
    %2824 = vmatpush.bf16.msra.mxu0 %v1703
    %2825 = vmatpush.bf16.msra.mxu0 %v1701
    %2826 = vmatpush.bf16.msra.mxu0 %v1699
    %2827 = vmatpush.bf16.msra.mxu0 %v1697
    %2828 = vmatmul.bf16.gmra.mxu0 %v658
    %v2829 = vpop.f32.mrf.mxu0
    %v2830 = vadd.f32 %v2801, %v2829
    %v2831 = vpop.f32.mrf.mxu0
    %v2832 = vadd.f32 %v2803, %v2831
    %2833 = vmatmul.bf16.gmra.mxu0 %v676
    %v2834 = vpop.f32.mrf.mxu0
    %v2835 = vadd.f32 %v2806, %v2834
    %v2836 = vpop.f32.mrf.mxu0
    %v2837 = vadd.f32 %v2808, %v2836
    %2838 = vmatmul.bf16.gmra.mxu0 %v694
    %v2839 = vpop.f32.mrf.mxu0
    %v2840 = vadd.f32 %v2811, %v2839
    %v2841 = vpop.f32.mrf.mxu0
    %v2842 = vadd.f32 %v2813, %v2841
    %2843 = vmatmul.bf16.gmra.mxu0 %v712
    %v2844 = vpop.f32.mrf.mxu0
    %v2845 = vadd.f32 %v2816, %v2844
    %v2846 = vpop.f32.mrf.mxu0
    %v2847 = vadd.f32 %v2818, %v2846
    %2848 = vdwg.mxu0
    %2849 = vmatpush.bf16.msra.mxu0 %v1727
    %2850 = vmatpush.bf16.msra.mxu0 %v1725
    %2851 = vmatpush.bf16.msra.mxu0 %v1723
    %2852 = vmatpush.bf16.msra.mxu0 %v1721
    %2853 = vmatpush.bf16.msra.mxu0 %v1719
    %2854 = vmatpush.bf16.msra.mxu0 %v1717
    %2855 = vmatpush.bf16.msra.mxu0 %v1715
    %2856 = vmatpush.bf16.msra.mxu0 %v1713
    %2857 = vmatmul.bf16.gmra.mxu0 %v659
    %v2858 = vpop.f32.mrf.mxu0
    %v2859 = vadd.f32 %v2830, %v2858
    %v2860 = vpop.f32.mrf.mxu0
    %v2861 = vadd.f32 %v2832, %v2860
    %2862 = vmatmul.bf16.gmra.mxu0 %v677
    %v2863 = vpop.f32.mrf.mxu0
    %v2864 = vadd.f32 %v2835, %v2863
    %v2865 = vpop.f32.mrf.mxu0
    %v2866 = vadd.f32 %v2837, %v2865
    %2867 = vmatmul.bf16.gmra.mxu0 %v695
    %v2868 = vpop.f32.mrf.mxu0
    %v2869 = vadd.f32 %v2840, %v2868
    %v2870 = vpop.f32.mrf.mxu0
    %v2871 = vadd.f32 %v2842, %v2870
    %2872 = vmatmul.bf16.gmra.mxu0 %v713
    %v2873 = vpop.f32.mrf.mxu0
    %v2874 = vadd.f32 %v2845, %v2873
    %v2875 = vpop.f32.mrf.mxu0
    %v2876 = vadd.f32 %v2847, %v2875
    %2877 = vdwg.mxu0
    %2878 = vmatpush.bf16.msra.mxu0 %v1743
    %2879 = vmatpush.bf16.msra.mxu0 %v1741
    %2880 = vmatpush.bf16.msra.mxu0 %v1739
    %2881 = vmatpush.bf16.msra.mxu0 %v1737
    %2882 = vmatpush.bf16.msra.mxu0 %v1735
    %2883 = vmatpush.bf16.msra.mxu0 %v1733
    %2884 = vmatpush.bf16.msra.mxu0 %v1731
    %2885 = vmatpush.bf16.msra.mxu0 %v1729
    %2886 = vmatmul.bf16.gmra.mxu0 %v660
    %v2887 = vpop.f32.mrf.mxu0
    %v2888 = vadd.f32 %v2859, %v2887
    %v2889 = vpop.f32.mrf.mxu0
    %v2890 = vadd.f32 %v2861, %v2889
    %2891 = vmatmul.bf16.gmra.mxu0 %v678
    %v2892 = vpop.f32.mrf.mxu0
    %v2893 = vadd.f32 %v2864, %v2892
    %v2894 = vpop.f32.mrf.mxu0
    %v2895 = vadd.f32 %v2866, %v2894
    %2896 = vmatmul.bf16.gmra.mxu0 %v696
    %v2897 = vpop.f32.mrf.mxu0
    %v2898 = vadd.f32 %v2869, %v2897
    %v2899 = vpop.f32.mrf.mxu0
    %v2900 = vadd.f32 %v2871, %v2899
    %2901 = vmatmul.bf16.gmra.mxu0 %v714
    %v2902 = vpop.f32.mrf.mxu0
    %v2903 = vadd.f32 %v2874, %v2902
    %v2904 = vpop.f32.mrf.mxu0
    %v2905 = vadd.f32 %v2876, %v2904
    %2906 = vdwg.mxu0
    %2907 = vmatpush.bf16.msra.mxu0 %v1759
    %2908 = vmatpush.bf16.msra.mxu0 %v1757
    %2909 = vmatpush.bf16.msra.mxu0 %v1755
    %2910 = vmatpush.bf16.msra.mxu0 %v1753
    %2911 = vmatpush.bf16.msra.mxu0 %v1751
    %2912 = vmatpush.bf16.msra.mxu0 %v1749
    %2913 = vmatpush.bf16.msra.mxu0 %v1747
    %2914 = vmatpush.bf16.msra.mxu0 %v1745
    %2915 = vmatmul.bf16.gmra.mxu0 %v661
    %v2916 = vpop.f32.mrf.mxu0
    %v2917 = vadd.f32 %v2888, %v2916
    %v2918 = vpop.f32.mrf.mxu0
    %v2919 = vadd.f32 %v2890, %v2918
    %2920 = vmatmul.bf16.gmra.mxu0 %v679
    %v2921 = vpop.f32.mrf.mxu0
    %v2922 = vadd.f32 %v2893, %v2921
    %v2923 = vpop.f32.mrf.mxu0
    %v2924 = vadd.f32 %v2895, %v2923
    %2925 = vmatmul.bf16.gmra.mxu0 %v697
    %v2926 = vpop.f32.mrf.mxu0
    %v2927 = vadd.f32 %v2898, %v2926
    %v2928 = vpop.f32.mrf.mxu0
    %v2929 = vadd.f32 %v2900, %v2928
    %2930 = vmatmul.bf16.gmra.mxu0 %v715
    %v2931 = vpop.f32.mrf.mxu0
    %v2932 = vadd.f32 %v2903, %v2931
    %v2933 = vpop.f32.mrf.mxu0
    %v2934 = vadd.f32 %v2905, %v2933
    %2935 = vdwg.mxu0
    %2936 = vmatpush.bf16.msra.mxu0 %v1775
    %2937 = vmatpush.bf16.msra.mxu0 %v1773
    %2938 = vmatpush.bf16.msra.mxu0 %v1771
    %2939 = vmatpush.bf16.msra.mxu0 %v1769
    %2940 = vmatpush.bf16.msra.mxu0 %v1767
    %2941 = vmatpush.bf16.msra.mxu0 %v1765
    %2942 = vmatpush.bf16.msra.mxu0 %v1763
    %2943 = vmatpush.bf16.msra.mxu0 %v1761
    %2944 = vmatmul.bf16.gmra.mxu0 %v662
    %v2945 = vpop.f32.mrf.mxu0
    %v2946 = vadd.f32 %v2917, %v2945
    %v2947 = vpop.f32.mrf.mxu0
    %v2948 = vadd.f32 %v2919, %v2947
    %2949 = vmatmul.bf16.gmra.mxu0 %v680
    %v2950 = vpop.f32.mrf.mxu0
    %v2951 = vadd.f32 %v2922, %v2950
    %v2952 = vpop.f32.mrf.mxu0
    %v2953 = vadd.f32 %v2924, %v2952
    %2954 = vmatmul.bf16.gmra.mxu0 %v698
    %v2955 = vpop.f32.mrf.mxu0
    %v2956 = vadd.f32 %v2927, %v2955
    %v2957 = vpop.f32.mrf.mxu0
    %v2958 = vadd.f32 %v2929, %v2957
    %2959 = vmatmul.bf16.gmra.mxu0 %v716
    %v2960 = vpop.f32.mrf.mxu0
    %v2961 = vadd.f32 %v2932, %v2960
    %v2962 = vpop.f32.mrf.mxu0
    %v2963 = vadd.f32 %v2934, %v2962
    %2964 = vdwg.mxu0
    %2965 = vmatpush.bf16.msra.mxu0 %v1791
    %2966 = vmatpush.bf16.msra.mxu0 %v1789
    %2967 = vmatpush.bf16.msra.mxu0 %v1787
    %2968 = vmatpush.bf16.msra.mxu0 %v1785
    %2969 = vmatpush.bf16.msra.mxu0 %v1783
    %2970 = vmatpush.bf16.msra.mxu0 %v1781
    %2971 = vmatpush.bf16.msra.mxu0 %v1779
    %2972 = vmatpush.bf16.msra.mxu0 %v1777
    %2973 = vmatmul.bf16.gmra.mxu0 %v663
    %v2974 = vpop.f32.mrf.mxu0
    %v2975 = vadd.f32 %v2946, %v2974
    %v2976 = vpop.f32.mrf.mxu0
    %v2977 = vadd.f32 %v2948, %v2976
    %2978 = vmatmul.bf16.gmra.mxu0 %v681
    %v2979 = vpop.f32.mrf.mxu0
    %v2980 = vadd.f32 %v2951, %v2979
    %v2981 = vpop.f32.mrf.mxu0
    %v2982 = vadd.f32 %v2953, %v2981
    %2983 = vmatmul.bf16.gmra.mxu0 %v699
    %v2984 = vpop.f32.mrf.mxu0
    %v2985 = vadd.f32 %v2956, %v2984
    %v2986 = vpop.f32.mrf.mxu0
    %v2987 = vadd.f32 %v2958, %v2986
    %2988 = vmatmul.bf16.gmra.mxu0 %v717
    %v2989 = vpop.f32.mrf.mxu0
    %v2990 = vadd.f32 %v2961, %v2989
    %v2991 = vpop.f32.mrf.mxu0
    %v2992 = vadd.f32 %v2963, %v2991
    %2993 = vdwg.mxu0
    %2994 = vmatpush.bf16.msra.mxu0 %v1807
    %2995 = vmatpush.bf16.msra.mxu0 %v1805
    %2996 = vmatpush.bf16.msra.mxu0 %v1803
    %2997 = vmatpush.bf16.msra.mxu0 %v1801
    %2998 = vmatpush.bf16.msra.mxu0 %v1799
    %2999 = vmatpush.bf16.msra.mxu0 %v1797
    %3000 = vmatpush.bf16.msra.mxu0 %v1795
    %3001 = vmatpush.bf16.msra.mxu0 %v1793
    %3002 = vmatmul.bf16.gmra.mxu0 %v664
    %v3003 = vpop.f32.mrf.mxu0
    %v3004 = vadd.f32 %v2975, %v3003
    %v3005 = vpop.f32.mrf.mxu0
    %v3006 = vadd.f32 %v2977, %v3005
    %3007 = vmatmul.bf16.gmra.mxu0 %v682
    %v3008 = vpop.f32.mrf.mxu0
    %v3009 = vadd.f32 %v2980, %v3008
    %v3010 = vpop.f32.mrf.mxu0
    %v3011 = vadd.f32 %v2982, %v3010
    %3012 = vmatmul.bf16.gmra.mxu0 %v700
    %v3013 = vpop.f32.mrf.mxu0
    %v3014 = vadd.f32 %v2985, %v3013
    %v3015 = vpop.f32.mrf.mxu0
    %v3016 = vadd.f32 %v2987, %v3015
    %3017 = vmatmul.bf16.gmra.mxu0 %v718
    %v3018 = vpop.f32.mrf.mxu0
    %v3019 = vadd.f32 %v2990, %v3018
    %v3020 = vpop.f32.mrf.mxu0
    %v3021 = vadd.f32 %v2992, %v3020
    %3022 = vdwg.mxu0
    %3023 = vmatpush.bf16.msra.mxu0 %v1823
    %3024 = vmatpush.bf16.msra.mxu0 %v1821
    %3025 = vmatpush.bf16.msra.mxu0 %v1819
    %3026 = vmatpush.bf16.msra.mxu0 %v1817
    %3027 = vmatpush.bf16.msra.mxu0 %v1815
    %3028 = vmatpush.bf16.msra.mxu0 %v1813
    %3029 = vmatpush.bf16.msra.mxu0 %v1811
    %3030 = vmatpush.bf16.msra.mxu0 %v1809
    %3031 = vmatmul.bf16.gmra.mxu0 %v665
    %v3032 = vpop.f32.mrf.mxu0
    %v3033 = vadd.f32 %v3004, %v3032
    %v3034 = vpop.f32.mrf.mxu0
    %v3035 = vadd.f32 %v3006, %v3034
    %3036 = vmatmul.bf16.gmra.mxu0 %v683
    %v3037 = vpop.f32.mrf.mxu0
    %v3038 = vadd.f32 %v3009, %v3037
    %v3039 = vpop.f32.mrf.mxu0
    %v3040 = vadd.f32 %v3011, %v3039
    %3041 = vmatmul.bf16.gmra.mxu0 %v701
    %v3042 = vpop.f32.mrf.mxu0
    %v3043 = vadd.f32 %v3014, %v3042
    %v3044 = vpop.f32.mrf.mxu0
    %v3045 = vadd.f32 %v3016, %v3044
    %3046 = vmatmul.bf16.gmra.mxu0 %v719
    %v3047 = vpop.f32.mrf.mxu0
    %v3048 = vadd.f32 %v3019, %v3047
    %v3049 = vpop.f32.mrf.mxu0
    %v3050 = vadd.f32 %v3021, %v3049
    %3051 = vdwg.mxu0
    %3052 = vmatpush.bf16.msra.mxu0 %v1839
    %3053 = vmatpush.bf16.msra.mxu0 %v1837
    %3054 = vmatpush.bf16.msra.mxu0 %v1835
    %3055 = vmatpush.bf16.msra.mxu0 %v1833
    %3056 = vmatpush.bf16.msra.mxu0 %v1831
    %3057 = vmatpush.bf16.msra.mxu0 %v1829
    %3058 = vmatpush.bf16.msra.mxu0 %v1827
    %3059 = vmatpush.bf16.msra.mxu0 %v1825
    %3060 = vmatmul.bf16.gmra.mxu0 %v666
    %v3061 = vpop.f32.mrf.mxu0
    %v3062 = vadd.f32 %v3033, %v3061
    %v3063 = vpop.f32.mrf.mxu0
    %v3064 = vadd.f32 %v3035, %v3063
    %3065 = vmatmul.bf16.gmra.mxu0 %v684
    %v3066 = vpop.f32.mrf.mxu0
    %v3067 = vadd.f32 %v3038, %v3066
    %v3068 = vpop.f32.mrf.mxu0
    %v3069 = vadd.f32 %v3040, %v3068
    %3070 = vmatmul.bf16.gmra.mxu0 %v702
    %v3071 = vpop.f32.mrf.mxu0
    %v3072 = vadd.f32 %v3043, %v3071
    %v3073 = vpop.f32.mrf.mxu0
    %v3074 = vadd.f32 %v3045, %v3073
    %3075 = vmatmul.bf16.gmra.mxu0 %v720
    %v3076 = vpop.f32.mrf.mxu0
    %v3077 = vadd.f32 %v3048, %v3076
    %v3078 = vpop.f32.mrf.mxu0
    %v3079 = vadd.f32 %v3050, %v3078
    %3080 = vdwg.mxu0
    %3081 = vmatpush.bf16.msra.mxu0 %v1855
    %3082 = vmatpush.bf16.msra.mxu0 %v1853
    %3083 = vmatpush.bf16.msra.mxu0 %v1851
    %3084 = vmatpush.bf16.msra.mxu0 %v1849
    %3085 = vmatpush.bf16.msra.mxu0 %v1847
    %3086 = vmatpush.bf16.msra.mxu0 %v1845
    %3087 = vmatpush.bf16.msra.mxu0 %v1843
    %3088 = vmatpush.bf16.msra.mxu0 %v1841
    %3089 = vmatmul.bf16.gmra.mxu0 %v667
    %v3090 = vpop.f32.mrf.mxu0
    %v3091 = vadd.f32 %v3062, %v3090
    %v3092 = vpop.f32.mrf.mxu0
    %v3093 = vadd.f32 %v3064, %v3092
    %3094 = vmatmul.bf16.gmra.mxu0 %v685
    %v3095 = vpop.f32.mrf.mxu0
    %v3096 = vadd.f32 %v3067, %v3095
    %v3097 = vpop.f32.mrf.mxu0
    %v3098 = vadd.f32 %v3069, %v3097
    %3099 = vmatmul.bf16.gmra.mxu0 %v703
    %v3100 = vpop.f32.mrf.mxu0
    %v3101 = vadd.f32 %v3072, %v3100
    %v3102 = vpop.f32.mrf.mxu0
    %v3103 = vadd.f32 %v3074, %v3102
    %3104 = vmatmul.bf16.gmra.mxu0 %v721
    %v3105 = vpop.f32.mrf.mxu0
    %v3106 = vadd.f32 %v3077, %v3105
    %v3107 = vpop.f32.mrf.mxu0
    %v3108 = vadd.f32 %v3079, %v3107
    %3109 = vdwg.mxu0
    %3110 = vmatpush.bf16.msra.mxu0 %v1871
    %3111 = vmatpush.bf16.msra.mxu0 %v1869
    %3112 = vmatpush.bf16.msra.mxu0 %v1867
    %3113 = vmatpush.bf16.msra.mxu0 %v1865
    %3114 = vmatpush.bf16.msra.mxu0 %v1863
    %3115 = vmatpush.bf16.msra.mxu0 %v1861
    %3116 = vmatpush.bf16.msra.mxu0 %v1859
    %3117 = vmatpush.bf16.msra.mxu0 %v1857
    %3118 = vmatmul.bf16.gmra.mxu0 %v668
    %v3119 = vpop.f32.mrf.mxu0
    %v3120 = vadd.f32 %v3091, %v3119
    %v3121 = vpop.f32.mrf.mxu0
    %v3122 = vadd.f32 %v3093, %v3121
    %3123 = vmatmul.bf16.gmra.mxu0 %v686
    %v3124 = vpop.f32.mrf.mxu0
    %v3125 = vadd.f32 %v3096, %v3124
    %v3126 = vpop.f32.mrf.mxu0
    %v3127 = vadd.f32 %v3098, %v3126
    %3128 = vmatmul.bf16.gmra.mxu0 %v704
    %v3129 = vpop.f32.mrf.mxu0
    %v3130 = vadd.f32 %v3101, %v3129
    %v3131 = vpop.f32.mrf.mxu0
    %v3132 = vadd.f32 %v3103, %v3131
    %3133 = vmatmul.bf16.gmra.mxu0 %v722
    %v3134 = vpop.f32.mrf.mxu0
    %v3135 = vadd.f32 %v3106, %v3134
    %v3136 = vpop.f32.mrf.mxu0
    %v3137 = vadd.f32 %v3108, %v3136
    %3138 = vdwg.mxu0
    %3139 = vmatpush.bf16.msra.mxu0 %v1887
    %3140 = vmatpush.bf16.msra.mxu0 %v1885
    %3141 = vmatpush.bf16.msra.mxu0 %v1883
    %3142 = vmatpush.bf16.msra.mxu0 %v1881
    %3143 = vmatpush.bf16.msra.mxu0 %v1879
    %3144 = vmatpush.bf16.msra.mxu0 %v1877
    %3145 = vmatpush.bf16.msra.mxu0 %v1875
    %3146 = vmatpush.bf16.msra.mxu0 %v1873
    %3147 = vmatmul.bf16.gmra.mxu0 %v669
    %v3148 = vpop.f32.mrf.mxu0
    %v3149 = vadd.f32 %v3120, %v3148
    %v3150 = vpop.f32.mrf.mxu0
    %v3151 = vadd.f32 %v3122, %v3150
    %3152 = vmatmul.bf16.gmra.mxu0 %v687
    %v3153 = vpop.f32.mrf.mxu0
    %v3154 = vadd.f32 %v3125, %v3153
    %v3155 = vpop.f32.mrf.mxu0
    %v3156 = vadd.f32 %v3127, %v3155
    %3157 = vmatmul.bf16.gmra.mxu0 %v705
    %v3158 = vpop.f32.mrf.mxu0
    %v3159 = vadd.f32 %v3130, %v3158
    %v3160 = vpop.f32.mrf.mxu0
    %v3161 = vadd.f32 %v3132, %v3160
    %3162 = vmatmul.bf16.gmra.mxu0 %v723
    %v3163 = vpop.f32.mrf.mxu0
    %v3164 = vadd.f32 %v3135, %v3163
    %v3165 = vpop.f32.mrf.mxu0
    %v3166 = vadd.f32 %v3137, %v3165
    %3167 = vdwg.mxu0
    %3168 = vmatpush.bf16.msra.mxu0 %v1903
    %3169 = vmatpush.bf16.msra.mxu0 %v1901
    %3170 = vmatpush.bf16.msra.mxu0 %v1899
    %3171 = vmatpush.bf16.msra.mxu0 %v1897
    %3172 = vmatpush.bf16.msra.mxu0 %v1895
    %3173 = vmatpush.bf16.msra.mxu0 %v1893
    %3174 = vmatpush.bf16.msra.mxu0 %v1891
    %3175 = vmatpush.bf16.msra.mxu0 %v1889
    %3176 = vmatmul.bf16.gmra.mxu0 %v670
    %v3177 = vpop.f32.mrf.mxu0
    %v3178 = vadd.f32 %v3149, %v3177
    %v3179 = vpop.f32.mrf.mxu0
    %v3180 = vadd.f32 %v3151, %v3179
    %3181 = vmatmul.bf16.gmra.mxu0 %v688
    %v3182 = vpop.f32.mrf.mxu0
    %v3183 = vadd.f32 %v3154, %v3182
    %v3184 = vpop.f32.mrf.mxu0
    %v3185 = vadd.f32 %v3156, %v3184
    %3186 = vmatmul.bf16.gmra.mxu0 %v706
    %v3187 = vpop.f32.mrf.mxu0
    %v3188 = vadd.f32 %v3159, %v3187
    %v3189 = vpop.f32.mrf.mxu0
    %v3190 = vadd.f32 %v3161, %v3189
    %3191 = vmatmul.bf16.gmra.mxu0 %v724
    %v3192 = vpop.f32.mrf.mxu0
    %v3193 = vadd.f32 %v3164, %v3192
    %v3194 = vpop.f32.mrf.mxu0
    %v3195 = vadd.f32 %v3166, %v3194
    %3196 = vdwg.mxu0
    %3197 = vmatpush.bf16.msra.mxu0 %v1919
    %3198 = vmatpush.bf16.msra.mxu0 %v1917
    %3199 = vmatpush.bf16.msra.mxu0 %v1915
    %3200 = vmatpush.bf16.msra.mxu0 %v1913
    %3201 = vmatpush.bf16.msra.mxu0 %v1911
    %3202 = vmatpush.bf16.msra.mxu0 %v1909
    %3203 = vmatpush.bf16.msra.mxu0 %v1907
    %3204 = vmatpush.bf16.msra.mxu0 %v1905
    %3205 = vmatmul.bf16.gmra.mxu0 %v671
    %v3206 = vpop.f32.mrf.mxu0
    %v3207 = vadd.f32 %v3178, %v3206
    %v3208 = vpop.f32.mrf.mxu0
    %v3209 = vadd.f32 %v3180, %v3208
    %3210 = vmatmul.bf16.gmra.mxu0 %v689
    %v3211 = vpop.f32.mrf.mxu0
    %v3212 = vadd.f32 %v3183, %v3211
    %v3213 = vpop.f32.mrf.mxu0
    %v3214 = vadd.f32 %v3185, %v3213
    %3215 = vmatmul.bf16.gmra.mxu0 %v707
    %v3216 = vpop.f32.mrf.mxu0
    %v3217 = vadd.f32 %v3188, %v3216
    %v3218 = vpop.f32.mrf.mxu0
    %v3219 = vadd.f32 %v3190, %v3218
    %3220 = vmatmul.bf16.gmra.mxu0 %v725
    %v3221 = vpop.f32.mrf.mxu0
    %v3222 = vadd.f32 %v3193, %v3221
    %v3223 = vpop.f32.mrf.mxu0
    %v3224 = vadd.f32 %v3195, %v3223
    %3225 = vdwg.mxu0
    %3226 = vmatpush.bf16.msra.mxu0 %v1935
    %3227 = vmatpush.bf16.msra.mxu0 %v1933
    %3228 = vmatpush.bf16.msra.mxu0 %v1931
    %3229 = vmatpush.bf16.msra.mxu0 %v1929
    %3230 = vmatpush.bf16.msra.mxu0 %v1927
    %3231 = vmatpush.bf16.msra.mxu0 %v1925
    %3232 = vmatpush.bf16.msra.mxu0 %v1923
    %3233 = vmatpush.bf16.msra.mxu0 %v1921
    %3234 = vmatmul.bf16.gmra.mxu0 %v672
    %v3235 = vpop.f32.mrf.mxu0
    %v3236 = vadd.f32 %v3207, %v3235
    %v3237 = vpop.f32.mrf.mxu0
    %v3238 = vadd.f32 %v3209, %v3237
    %3239 = vmatmul.bf16.gmra.mxu0 %v690
    %v3240 = vpop.f32.mrf.mxu0
    %v3241 = vadd.f32 %v3212, %v3240
    %v3242 = vpop.f32.mrf.mxu0
    %v3243 = vadd.f32 %v3214, %v3242
    %3244 = vmatmul.bf16.gmra.mxu0 %v708
    %v3245 = vpop.f32.mrf.mxu0
    %v3246 = vadd.f32 %v3217, %v3245
    %v3247 = vpop.f32.mrf.mxu0
    %v3248 = vadd.f32 %v3219, %v3247
    %3249 = vmatmul.bf16.gmra.mxu0 %v726
    %v3250 = vpop.f32.mrf.mxu0
    %v3251 = vadd.f32 %v3222, %v3250
    %v3252 = vpop.f32.mrf.mxu0
    %v3253 = vadd.f32 %v3224, %v3252
    %3254 = vdwg.mxu0
    %3255 = vmatpush.bf16.msra.mxu0 %v1951
    %3256 = vmatpush.bf16.msra.mxu0 %v1949
    %3257 = vmatpush.bf16.msra.mxu0 %v1947
    %3258 = vmatpush.bf16.msra.mxu0 %v1945
    %3259 = vmatpush.bf16.msra.mxu0 %v1943
    %3260 = vmatpush.bf16.msra.mxu0 %v1941
    %3261 = vmatpush.bf16.msra.mxu0 %v1939
    %3262 = vmatpush.bf16.msra.mxu0 %v1937
    %3263 = vmatmul.bf16.gmra.mxu0 %v673
    %v3264 = vpop.f32.mrf.mxu0
    %v3265 = vadd.f32 %v3236, %v3264
    %v3266 = vpop.f32.mrf.mxu0
    %v3267 = vadd.f32 %v3238, %v3266
    %3268 = vmatmul.bf16.gmra.mxu0 %v691
    %v3269 = vpop.f32.mrf.mxu0
    %v3270 = vadd.f32 %v3241, %v3269
    %v3271 = vpop.f32.mrf.mxu0
    %v3272 = vadd.f32 %v3243, %v3271
    %3273 = vmatmul.bf16.gmra.mxu0 %v709
    %v3274 = vpop.f32.mrf.mxu0
    %v3275 = vadd.f32 %v3246, %v3274
    %v3276 = vpop.f32.mrf.mxu0
    %v3277 = vadd.f32 %v3248, %v3276
    %3278 = vmatmul.bf16.gmra.mxu0 %v727
    %v3279 = vpop.f32.mrf.mxu0
    %v3280 = vadd.f32 %v3251, %v3279
    %v3281 = vpop.f32.mrf.mxu0
    %v3282 = vadd.f32 %v3253, %v3281
    %3283 = vdwg.mxu0
    %v3284 = vadd.f32 %v64, %v2743
    %v3285 = vadd.f32 %v65, %v3265
    %v3286 = vadd.f32 %v66, %v2745
    %v3287 = vadd.f32 %v67, %v3267
    %v3288 = vadd.f32 %v68, %v2748
    %v3289 = vadd.f32 %v69, %v3270
    %v3290 = vadd.f32 %v70, %v2750
    %v3291 = vadd.f32 %v71, %v3272
    %v3292 = vadd.f32 %v72, %v2753
    %v3293 = vadd.f32 %v73, %v3275
    %v3294 = vadd.f32 %v74, %v2755
    %v3295 = vadd.f32 %v75, %v3277
    %v3296 = vadd.f32 %v76, %v2758
    %v3297 = vadd.f32 %v77, %v3280
    %v3298 = vadd.f32 %v78, %v2760
    %v3299 = vadd.f32 %v79, %v3282
    %3300 = vst [vmem:[#allocation2] sm:$0xff] %v3284
    %3301 = vst [vmem:[#allocation2 + $0x8] sm:$0xff] %v3285
    %3302 = vst [vmem:[#allocation2 + $0x10] sm:$0xff] %v3286
    %3303 = vst [vmem:[#allocation2 + $0x18] sm:$0xff] %v3287
    %3304 = vst [vmem:[#allocation2 + $0x20] sm:$0xff] %v3288
    %3305 = vst [vmem:[#allocation2 + $0x28] sm:$0xff] %v3289
    %3306 = vst [vmem:[#allocation2 + $0x30] sm:$0xff] %v3290
    %3307 = vst [vmem:[#allocation2 + $0x38] sm:$0xff] %v3291
    %3308 = vst [vmem:[#allocation2 + $0x40] sm:$0xff] %v3292
    %3309 = vst [vmem:[#allocation2 + $0x48] sm:$0xff] %v3293
    %3310 = vst [vmem:[#allocation2 + $0x50] sm:$0xff] %v3294
    %3311 = vst [vmem:[#allocation2 + $0x58] sm:$0xff] %v3295
    %3312 = vst [vmem:[#allocation2 + $0x60] sm:$0xff] %v3296
    %3313 = vst [vmem:[#allocation2 + $0x68] sm:$0xff] %v3297
    %3314 = vst [vmem:[#allocation2 + $0x70] sm:$0xff] %v3298
    %3315 = vst [vmem:[#allocation2 + $0x78] sm:$0xff] %v3299
    // Predicated region
    $region22: #{downsample_and_sample.1} parent=1 // pred_check
      %p3316 = pneg %p44
    $region23: #{downsample_and_sample.1} parent=1 // pred_check_branch
      %3318 = sbr.rel (%p3316) target = $region25
    $region24: #{downsample_and_sample.1} parent=1 // pred_region
      %v3319 = vld [vmem:[#allocation2] sm:$0xff]
      %v3320 = vld [vmem:[#allocation2 + $0x8] sm:$0xff]
      %v3321 = vld [vmem:[#allocation2 + $0x10] sm:$0xff]
      %v3322 = vld [vmem:[#allocation2 + $0x18] sm:$0xff]
      %v3323 = vld [vmem:[#allocation2 + $0x20] sm:$0xff]
      %v3324 = vld [vmem:[#allocation2 + $0x28] sm:$0xff]
      %v3325 = vld [vmem:[#allocation2 + $0x30] sm:$0xff]
      %v3326 = vld [vmem:[#allocation2 + $0x38] sm:$0xff]
      %v3327 = vld [vmem:[#allocation2 + $0x40] sm:$0xff]
      %v3328 = vld [vmem:[#allocation2 + $0x48] sm:$0xff]
      %v3329 = vld [vmem:[#allocation2 + $0x50] sm:$0xff]
      %v3330 = vld [vmem:[#allocation2 + $0x58] sm:$0xff]
      %v3331 = vld [vmem:[#allocation2 + $0x60] sm:$0xff]
      %v3332 = vld [vmem:[#allocation2 + $0x68] sm:$0xff]
      %v3333 = vld [vmem:[#allocation2 + $0x70] sm:$0xff]
      %v3334 = vld [vmem:[#allocation2 + $0x78] sm:$0xff]
      %3335 = vst [vmem:[#allocation8] sm:$0xff] %v3319
      %3336 = vst [vmem:[#allocation8 + $0x8] sm:$0xff] %v3320
      %3337 = vst [vmem:[#allocation8 + $0x10] sm:$0xff] %v3321
      %3338 = vst [vmem:[#allocation8 + $0x18] sm:$0xff] %v3322
      %3339 = vst [vmem:[#allocation8 + $0x20] sm:$0xff] %v3323
      %3340 = vst [vmem:[#allocation8 + $0x28] sm:$0xff] %v3324
      %3341 = vst [vmem:[#allocation8 + $0x30] sm:$0xff] %v3325
      %3342 = vst [vmem:[#allocation8 + $0x38] sm:$0xff] %v3326
      %3343 = vst [vmem:[#allocation8 + $0x40] sm:$0xff] %v3327
      %3344 = vst [vmem:[#allocation8 + $0x48] sm:$0xff] %v3328
      %3345 = vst [vmem:[#allocation8 + $0x50] sm:$0xff] %v3329
      %3346 = vst [vmem:[#allocation8 + $0x58] sm:$0xff] %v3330
      %3347 = vst [vmem:[#allocation8 + $0x60] sm:$0xff] %v3331
      %3348 = vst [vmem:[#allocation8 + $0x68] sm:$0xff] %v3332
      %3349 = vst [vmem:[#allocation8 + $0x70] sm:$0xff] %v3333
      %3350 = vst [vmem:[#allocation8 + $0x78] sm:$0xff] %v3334
    $region25: #{downsample_and_sample.1} parent=1 // pred_fallthru
      _
    // Predicated region
    $region26: #{downsample_and_sample.1} parent=1 // pred_check
      _
    $region27: #{downsample_and_sample.1} parent=1 // pred_check_branch
      %3352 = sbr.rel (0) target = $region29
    $region28: #{downsample_and_sample.1} parent=1 // pred_region
      %3354 = vsyncadd [#allocation5], 0
      %s3355 = sshll.u32 [#allocation8], 4
      %s3356 = int_to_ptr.vmem [resolvable:$true] %s3355
      %s3357 = sshll.u32 %s2, 4
      %s3358 = int_to_ptr.hbm [resolvable:$true] %s3357
      %3363 = dma.vmem_to_hbm [thread:$0]  %s3356, 2048, %s3358, [#allocation5], 256, 256, 16
    $region29: #{downsample_and_sample.1} parent=1 // pred_fallthru
      _
    // Predicated region
    $region30: #{downsample_and_sample.1} parent=1 // pred_check
      _
    $region31: #{downsample_and_sample.1} parent=1 // pred_check_branch
      %3365 = sbr.rel (0) target = $region33
    $region32: #{downsample_and_sample.1} parent=1 // pred_region
      %3367 = dma.done [#allocation5], 2048
    $region33: #{downsample_and_sample.1} parent=1 // pred_fallthru
      _
    %3368 = vsyncpa [#allocation4], 1
    %3369 = vsyncpa [#allocation7], 1
    %3370 = vsyncpa [#allocation5], 1

</llo_original>
